<compile_context>
chip_gen: v7x
topology: tpu7x:2x2x1
jax: 0.10.0
libtpu: 0.0.40
codegen_flags: <defaults>
</compile_context>

<pallas_src>
import jax
import jax.numpy as jnp
from jax import lax
from jax.experimental import pallas as pl
from jax.experimental.pallas import tpu as pltpu

BN_EPS = 1e-5
LANE = 128


# --------------------------------------------------------------------------
# Kernel
# --------------------------------------------------------------------------
def _wrist_kernel(
    x_ref,
    w1, b1, g1, be1,
    w2, b2, g2, be2,
    w3, b3, g3, be3,
    w4, b4, g4, be4,
    w5, b5,
    out_ref,
):
    """Whole forward pass in one kernel; weights + activations VMEM-resident.

    Weights are bf16 (native MXU dtype on v5e/v6e/v7x); matmuls accumulate in
    f32; ReLU and BatchNorm math stay in f32.
    """

    def linear(h, w_ref, b_ref):
        return (
            jnp.dot(
                h.astype(jnp.bfloat16),
                w_ref[...],
                preferred_element_type=jnp.float32,
            )
            + b_ref[...]
        )

    def relu(h):
        return jnp.maximum(h, 0.0)

    def batchnorm(h, g_ref, be_ref):
        # Training-mode BatchNorm1d folded to per-feature scale/shift.
        # Single-pass variance: var = E[h^2] - mean^2 (both reductions
        # back-to-back on the XLU), then two VPU passes over (B, F).
        mean = jnp.mean(h, axis=0, keepdims=True)
        mean_sq = jnp.mean(h * h, axis=0, keepdims=True)
        var = mean_sq - mean * mean
        scale = g_ref[...] * lax.rsqrt(var + BN_EPS)
        shift = be_ref[...] - mean * scale
        return h * scale + shift

    h = x_ref[...]
    h = batchnorm(relu(linear(h, w1, b1)), g1, be1)
    h = batchnorm(relu(linear(h, w2, b2)), g2, be2)
    h = batchnorm(relu(linear(h, w3, b3)), g3, be3)
    h = batchnorm(relu(linear(h, w4, b4)), g4, be4)
    out_ref[...] = linear(h, w5, b5)


# --------------------------------------------------------------------------
# Wrapper
# --------------------------------------------------------------------------
def wrist_network_forward(x, packed_params):
    """x: (B, window*joints*2) float32. packed_params: output of pack_params."""
    B, in_dim = x.shape
    in_pad = packed_params[0].shape[0]  # padded input dim stored in w1
    if in_pad != in_dim:
        x = jnp.pad(x, ((0, 0), (0, in_pad - in_dim)))

    vmem_spec = pl.BlockSpec(memory_space=pltpu.MemorySpace.VMEM)
    n_in = 1 + len(packed_params)

    out_padded = pl.pallas_call(
        _wrist_kernel,
        out_shape=jax.ShapeDtypeStruct((B, LANE), jnp.float32),
        in_specs=[vmem_spec] * n_in,
        out_specs=vmem_spec,
        compiler_params=pltpu.CompilerParams(vmem_limit_bytes=16 << 20),
    )(x, *packed_params)
    return out_padded[:, :3]


# --------------------------------------------------------------------------
# Parameters
# --------------------------------------------------------------------------
def init_params(key, window, joints=6):
    """PyTorch-like init (U(-k, k), k = 1/sqrt(fan_in)); BN gamma=1, beta=0.
    Weights stored as (in_features, out_features); biases/gammas/betas (1,F)."""
    dims = [(window * joints * 2, 512), (512, 512), (512, 256), (256, 256), (256, 3)]
    params = []
    keys = jax.random.split(key, 2 * len(dims))
    for i, (fan_in, fan_out) in enumerate(dims):
        k = 1.0 / jnp.sqrt(jnp.float32(fan_in))
        w = jax.random.uniform(keys[2 * i], (fan_in, fan_out), jnp.float32, -k, k)
        b = jax.random.uniform(keys[2 * i + 1], (1, fan_out), jnp.float32, -k, k)
        params.append(w)
        params.append(b)
        if i < 4:  # BN follows layers 1-4 only
            params.append(jnp.ones((1, fan_out), jnp.float32))   # gamma
            params.append(jnp.zeros((1, fan_out), jnp.float32))  # beta
    return tuple(params)


def pack_params(params):
    """bf16-cast the weights and zero-pad:
       - w1 input dim (96 -> 128) so the x tile is lane-dense,
       - w5/b5 output dim (3 -> 128) so the final store is an unmasked vst.
    Zero padding keeps the math identical; the wrapper slices [:, :3]."""
    (w1, b1, g1, be1,
     w2, b2, g2, be2,
     w3, b3, g3, be3,
     w4, b4, g4, be4,
     w5, b5) = params

    def pad_rows(w):
        r = (-w.shape[0]) % LANE
        return jnp.pad(w, ((0, r), (0, 0))) if r else w

    def pad_cols(a):
        c = (-a.shape[1]) % LANE
        return jnp.pad(a, ((0, 0), (0, c))) if c else a

    bf = lambda w: w.astype(jnp.bfloat16)

    return (
        bf(pad_rows(w1)), b1, g1, be1,   # w1: (128, 512) bf16
        bf(w2), b2, g2, be2,             # (512, 512) bf16
        bf(w3), b3, g3, be3,             # (512, 256) bf16
        bf(w4), b4, g4, be4,             # (256, 256) bf16
        bf(pad_cols(w5)), pad_cols(b5),  # w5: (256, 128) bf16, b5: (1, 128) f32
    )


# --------------------------------------------------------------------------
# References
# --------------------------------------------------------------------------
def reference_forward_bf16(x, packed_params):
    """Pure-JAX reference doing the exact same math as the kernel
    (bf16 weights, f32 accumulation, folded single-pass BN)."""
    (w1, b1, g1, be1,
     w2, b2, g2, be2,
     w3, b3, g3, be3,
     w4, b4, g4, be4,
     w5, b5) = packed_params

    def lin(h, w, b):
        return jnp.dot(h.astype(jnp.bfloat16), w,
                       preferred_element_type=jnp.float32) + b

    def bn(h, g, be):
        mean = jnp.mean(h, axis=0, keepdims=True)
        var = jnp.mean(h * h, axis=0, keepdims=True) - mean * mean
        scale = g * lax.rsqrt(var + BN_EPS)
        return h * scale + (be - mean * scale)

    in_pad = w1.shape[0]
    if x.shape[1] != in_pad:
        x = jnp.pad(x, ((0, 0), (0, in_pad - x.shape[1])))
    h = bn(jnp.maximum(lin(x, w1, b1), 0.0), g1, be1)
    h = bn(jnp.maximum(lin(h, w2, b2), 0.0), g2, be2)
    h = bn(jnp.maximum(lin(h, w3, b3), 0.0), g3, be3)
    h = bn(jnp.maximum(lin(h, w4, b4), 0.0), g4, be4)
    return lin(h, w5, b5)[:, :3]


def reference_forward_f32(x, params):
    """Full-precision PyTorch-semantics reference (training-mode BN)."""
    (w1, b1, g1, be1,
     w2, b2, g2, be2,
     w3, b3, g3, be3,
     w4, b4, g4, be4,
     w5, b5) = params

    def bn(h, g, be):
        mean = jnp.mean(h, axis=0, keepdims=True)
        var = jnp.mean((h - mean) ** 2, axis=0, keepdims=True)
        return g * (h - mean) / jnp.sqrt(var + BN_EPS) + be

    h = bn(jnp.maximum(x @ w1 + b1, 0.0), g1, be1)
    h = bn(jnp.maximum(h @ w2 + b2, 0.0), g2, be2)
    h = bn(jnp.maximum(h @ w3 + b3, 0.0), g3, be3)
    h = bn(jnp.maximum(h @ w4 + b4, 0.0), g4, be4)
    return h @ w5 + b5


# --------------------------------------------------------------------------
# Self-test
# --------------------------------------------------------------------------
if __name__ == "__main__":
    window, joints, batch = 8, 6, 8
    in_dim = window * joints * 2  # 96

    key = jax.random.PRNGKey(0)
    k_x, k_p = jax.random.split(key)
    x = jax.random.normal(k_x, (batch, in_dim), jnp.float32)
    params = init_params(k_p, window, joints)
    packed = pack_params(params)

    out = wrist_network_forward(x, packed)
    out = jax.block_until_ready(out)
    assert out.shape == (batch, 3)

    # Tight check: kernel vs. identical-math JAX reference (bf16 weights).
    ref_exact = reference_forward_bf16(x, packed)
    max_diff = jnp.max(jnp.abs(out - ref_exact))
    assert jnp.allclose(out, ref_exact, atol=5e-3, rtol=5e-3), (
        f"bf16-math mismatch, max abs diff {max_diff}"
    )

    # Loose check: kernel vs. full-f32 PyTorch-semantics reference
    # (bf16 weight storage introduces ~1e-2-level differences).
    ref_f32 = reference_forward_f32(x, params)
    max_diff_f32 = jnp.max(jnp.abs(out - ref_f32))
    assert jnp.allclose(out, ref_f32, atol=1.5e-1, rtol=1e-1), (
        f"f32 semantics drift too large, max abs diff {max_diff_f32}"
    )

    print("KERNEL_OK")
</pallas_src>

<mosaic_0001>
module attributes {stable_mosaic.version = 11 : i64} {
  func.func @_wrist_kernel(%arg0: memref<8x128xf32, #tpu.memory_space<vmem>>, %arg1: memref<128x512xbf16, #tpu.memory_space<vmem>>, %arg2: memref<1x512xf32, #tpu.memory_space<vmem>>, %arg3: memref<1x512xf32, #tpu.memory_space<vmem>>, %arg4: memref<1x512xf32, #tpu.memory_space<vmem>>, %arg5: memref<512x512xbf16, #tpu.memory_space<vmem>>, %arg6: memref<1x512xf32, #tpu.memory_space<vmem>>, %arg7: memref<1x512xf32, #tpu.memory_space<vmem>>, %arg8: memref<1x512xf32, #tpu.memory_space<vmem>>, %arg9: memref<512x256xbf16, #tpu.memory_space<vmem>>, %arg10: memref<1x256xf32, #tpu.memory_space<vmem>>, %arg11: memref<1x256xf32, #tpu.memory_space<vmem>>, %arg12: memref<1x256xf32, #tpu.memory_space<vmem>>, %arg13: memref<256x256xbf16, #tpu.memory_space<vmem>>, %arg14: memref<1x256xf32, #tpu.memory_space<vmem>>, %arg15: memref<1x256xf32, #tpu.memory_space<vmem>>, %arg16: memref<1x256xf32, #tpu.memory_space<vmem>>, %arg17: memref<256x128xbf16, #tpu.memory_space<vmem>>, %arg18: memref<1x128xf32, #tpu.memory_space<vmem>>, %arg19: memref<8x128xf32, #tpu.memory_space<vmem>>) attributes {dimension_semantics = [], scalar_prefetch = 0 : i64, scratch_operands = 0 : i64, tpu.core_type = #tpu.core_type<tc>} {
    %c0 = arith.constant 0 : index
    %c0_0 = arith.constant 0 : index
    %0 = vector.load %arg0[%c0, %c0_0] : memref<8x128xf32, #tpu.memory_space<vmem>>, vector<8x128xf32>
    %1 = arith.truncf %0 : vector<8x128xf32> to vector<8x128xbf16>
    %c0_1 = arith.constant 0 : index
    %c0_2 = arith.constant 0 : index
    %2 = vector.load %arg1[%c0_1, %c0_2] : memref<128x512xbf16, #tpu.memory_space<vmem>>, vector<128x512xbf16>
    %cst = arith.constant dense<0.000000e+00> : vector<8x512xf32>
    %3 = tpu.matmul %1, %2, %cst {dimension_numbers = #tpu.dot_dimension_numbers<[1], [0], [0], [1], [0, 0, 1, 1], [], []>} : vector<8x128xbf16>, vector<128x512xbf16>, vector<8x512xf32> -> vector<8x512xf32>
    %c0_3 = arith.constant 0 : index
    %c0_4 = arith.constant 0 : index
    %4 = vector.load %arg2[%c0_3, %c0_4] : memref<1x512xf32, #tpu.memory_space<vmem>>, vector<1x512xf32>
    %5 = vector.broadcast %4 : vector<1x512xf32> to vector<8x512xf32>
    %6 = arith.addf %3, %5 : vector<8x512xf32>
    %cst_5 = arith.constant 0.000000e+00 : f32
    %7 = vector.broadcast %cst_5 : f32 to vector<8x512xf32>
    %8 = arith.maximumf %6, %7 : vector<8x512xf32>
    %cst_6 = arith.constant dense<0.000000e+00> : vector<512xf32>
    %9 = vector.multi_reduction <add>, %8, %cst_6 [0] : vector<8x512xf32> to vector<512xf32>
    %10 = vector.shape_cast %9 : vector<512xf32> to vector<1x512xf32>
    %cst_7 = arith.constant 8.000000e+00 : f32
    %11 = vector.broadcast %cst_7 : f32 to vector<1x512xf32>
    %12 = arith.divf %10, %11 : vector<1x512xf32>
    %13 = arith.mulf %8, %8 : vector<8x512xf32>
    %cst_8 = arith.constant dense<0.000000e+00> : vector<512xf32>
    %14 = vector.multi_reduction <add>, %13, %cst_8 [0] : vector<8x512xf32> to vector<512xf32>
    %15 = vector.shape_cast %14 : vector<512xf32> to vector<1x512xf32>
    %cst_9 = arith.constant 8.000000e+00 : f32
    %16 = vector.broadcast %cst_9 : f32 to vector<1x512xf32>
    %17 = arith.divf %15, %16 : vector<1x512xf32>
    %18 = arith.mulf %12, %12 : vector<1x512xf32>
    %19 = arith.subf %17, %18 : vector<1x512xf32>
    %c0_10 = arith.constant 0 : index
    %c0_11 = arith.constant 0 : index
    %20 = vector.load %arg3[%c0_10, %c0_11] : memref<1x512xf32, #tpu.memory_space<vmem>>, vector<1x512xf32>
    %cst_12 = arith.constant 9.99999974E-6 : f32
    %21 = vector.broadcast %cst_12 : f32 to vector<1x512xf32>
    %22 = arith.addf %19, %21 : vector<1x512xf32>
    %23 = math.rsqrt %22 : vector<1x512xf32>
    %24 = arith.mulf %20, %23 : vector<1x512xf32>
    %c0_13 = arith.constant 0 : index
    %c0_14 = arith.constant 0 : index
    %25 = vector.load %arg4[%c0_13, %c0_14] : memref<1x512xf32, #tpu.memory_space<vmem>>, vector<1x512xf32>
    %26 = arith.mulf %12, %24 : vector<1x512xf32>
    %27 = arith.subf %25, %26 : vector<1x512xf32>
    %28 = vector.broadcast %24 : vector<1x512xf32> to vector<8x512xf32>
    %29 = arith.mulf %8, %28 : vector<8x512xf32>
    %30 = vector.broadcast %27 : vector<1x512xf32> to vector<8x512xf32>
    %31 = arith.addf %29, %30 : vector<8x512xf32>
    %32 = arith.truncf %31 : vector<8x512xf32> to vector<8x512xbf16>
    %c0_15 = arith.constant 0 : index
    %c0_16 = arith.constant 0 : index
    %33 = vector.load %arg5[%c0_15, %c0_16] : memref<512x512xbf16, #tpu.memory_space<vmem>>, vector<512x512xbf16>
    %cst_17 = arith.constant dense<0.000000e+00> : vector<8x512xf32>
    %34 = tpu.matmul %32, %33, %cst_17 {dimension_numbers = #tpu.dot_dimension_numbers<[1], [0], [0], [1], [0, 0, 1, 1], [], []>} : vector<8x512xbf16>, vector<512x512xbf16>, vector<8x512xf32> -> vector<8x512xf32>
    %c0_18 = arith.constant 0 : index
    %c0_19 = arith.constant 0 : index
    %35 = vector.load %arg6[%c0_18, %c0_19] : memref<1x512xf32, #tpu.memory_space<vmem>>, vector<1x512xf32>
    %36 = vector.broadcast %35 : vector<1x512xf32> to vector<8x512xf32>
    %37 = arith.addf %34, %36 : vector<8x512xf32>
    %cst_20 = arith.constant 0.000000e+00 : f32
    %38 = vector.broadcast %cst_20 : f32 to vector<8x512xf32>
    %39 = arith.maximumf %37, %38 : vector<8x512xf32>
    %cst_21 = arith.constant dense<0.000000e+00> : vector<512xf32>
    %40 = vector.multi_reduction <add>, %39, %cst_21 [0] : vector<8x512xf32> to vector<512xf32>
    %41 = vector.shape_cast %40 : vector<512xf32> to vector<1x512xf32>
    %cst_22 = arith.constant 8.000000e+00 : f32
    %42 = vector.broadcast %cst_22 : f32 to vector<1x512xf32>
    %43 = arith.divf %41, %42 : vector<1x512xf32>
    %44 = arith.mulf %39, %39 : vector<8x512xf32>
    %cst_23 = arith.constant dense<0.000000e+00> : vector<512xf32>
    %45 = vector.multi_reduction <add>, %44, %cst_23 [0] : vector<8x512xf32> to vector<512xf32>
    %46 = vector.shape_cast %45 : vector<512xf32> to vector<1x512xf32>
    %cst_24 = arith.constant 8.000000e+00 : f32
    %47 = vector.broadcast %cst_24 : f32 to vector<1x512xf32>
    %48 = arith.divf %46, %47 : vector<1x512xf32>
    %49 = arith.mulf %43, %43 : vector<1x512xf32>
    %50 = arith.subf %48, %49 : vector<1x512xf32>
    %c0_25 = arith.constant 0 : index
    %c0_26 = arith.constant 0 : index
    %51 = vector.load %arg7[%c0_25, %c0_26] : memref<1x512xf32, #tpu.memory_space<vmem>>, vector<1x512xf32>
    %cst_27 = arith.constant 9.99999974E-6 : f32
    %52 = vector.broadcast %cst_27 : f32 to vector<1x512xf32>
    %53 = arith.addf %50, %52 : vector<1x512xf32>
    %54 = math.rsqrt %53 : vector<1x512xf32>
    %55 = arith.mulf %51, %54 : vector<1x512xf32>
    %c0_28 = arith.constant 0 : index
    %c0_29 = arith.constant 0 : index
    %56 = vector.load %arg8[%c0_28, %c0_29] : memref<1x512xf32, #tpu.memory_space<vmem>>, vector<1x512xf32>
    %57 = arith.mulf %43, %55 : vector<1x512xf32>
    %58 = arith.subf %56, %57 : vector<1x512xf32>
    %59 = vector.broadcast %55 : vector<1x512xf32> to vector<8x512xf32>
    %60 = arith.mulf %39, %59 : vector<8x512xf32>
    %61 = vector.broadcast %58 : vector<1x512xf32> to vector<8x512xf32>
    %62 = arith.addf %60, %61 : vector<8x512xf32>
    %63 = arith.truncf %62 : vector<8x512xf32> to vector<8x512xbf16>
    %c0_30 = arith.constant 0 : index
    %c0_31 = arith.constant 0 : index
    %64 = vector.load %arg9[%c0_30, %c0_31] : memref<512x256xbf16, #tpu.memory_space<vmem>>, vector<512x256xbf16>
    %cst_32 = arith.constant dense<0.000000e+00> : vector<8x256xf32>
    %65 = tpu.matmul %63, %64, %cst_32 {dimension_numbers = #tpu.dot_dimension_numbers<[1], [0], [0], [1], [0, 0, 1, 1], [], []>} : vector<8x512xbf16>, vector<512x256xbf16>, vector<8x256xf32> -> vector<8x256xf32>
    %c0_33 = arith.constant 0 : index
    %c0_34 = arith.constant 0 : index
    %66 = vector.load %arg10[%c0_33, %c0_34] : memref<1x256xf32, #tpu.memory_space<vmem>>, vector<1x256xf32>
    %67 = vector.broadcast %66 : vector<1x256xf32> to vector<8x256xf32>
    %68 = arith.addf %65, %67 : vector<8x256xf32>
    %cst_35 = arith.constant 0.000000e+00 : f32
    %69 = vector.broadcast %cst_35 : f32 to vector<8x256xf32>
    %70 = arith.maximumf %68, %69 : vector<8x256xf32>
    %cst_36 = arith.constant dense<0.000000e+00> : vector<256xf32>
    %71 = vector.multi_reduction <add>, %70, %cst_36 [0] : vector<8x256xf32> to vector<256xf32>
    %72 = vector.shape_cast %71 : vector<256xf32> to vector<1x256xf32>
    %cst_37 = arith.constant 8.000000e+00 : f32
    %73 = vector.broadcast %cst_37 : f32 to vector<1x256xf32>
    %74 = arith.divf %72, %73 : vector<1x256xf32>
    %75 = arith.mulf %70, %70 : vector<8x256xf32>
    %cst_38 = arith.constant dense<0.000000e+00> : vector<256xf32>
    %76 = vector.multi_reduction <add>, %75, %cst_38 [0] : vector<8x256xf32> to vector<256xf32>
    %77 = vector.shape_cast %76 : vector<256xf32> to vector<1x256xf32>
    %cst_39 = arith.constant 8.000000e+00 : f32
    %78 = vector.broadcast %cst_39 : f32 to vector<1x256xf32>
    %79 = arith.divf %77, %78 : vector<1x256xf32>
    %80 = arith.mulf %74, %74 : vector<1x256xf32>
    %81 = arith.subf %79, %80 : vector<1x256xf32>
    %c0_40 = arith.constant 0 : index
    %c0_41 = arith.constant 0 : index
    %82 = vector.load %arg11[%c0_40, %c0_41] : memref<1x256xf32, #tpu.memory_space<vmem>>, vector<1x256xf32>
    %cst_42 = arith.constant 9.99999974E-6 : f32
    %83 = vector.broadcast %cst_42 : f32 to vector<1x256xf32>
    %84 = arith.addf %81, %83 : vector<1x256xf32>
    %85 = math.rsqrt %84 : vector<1x256xf32>
    %86 = arith.mulf %82, %85 : vector<1x256xf32>
    %c0_43 = arith.constant 0 : index
    %c0_44 = arith.constant 0 : index
    %87 = vector.load %arg12[%c0_43, %c0_44] : memref<1x256xf32, #tpu.memory_space<vmem>>, vector<1x256xf32>
    %88 = arith.mulf %74, %86 : vector<1x256xf32>
    %89 = arith.subf %87, %88 : vector<1x256xf32>
    %90 = vector.broadcast %86 : vector<1x256xf32> to vector<8x256xf32>
    %91 = arith.mulf %70, %90 : vector<8x256xf32>
    %92 = vector.broadcast %89 : vector<1x256xf32> to vector<8x256xf32>
    %93 = arith.addf %91, %92 : vector<8x256xf32>
    %94 = arith.truncf %93 : vector<8x256xf32> to vector<8x256xbf16>
    %c0_45 = arith.constant 0 : index
    %c0_46 = arith.constant 0 : index
    %95 = vector.load %arg13[%c0_45, %c0_46] : memref<256x256xbf16, #tpu.memory_space<vmem>>, vector<256x256xbf16>
    %cst_47 = arith.constant dense<0.000000e+00> : vector<8x256xf32>
    %96 = tpu.matmul %94, %95, %cst_47 {dimension_numbers = #tpu.dot_dimension_numbers<[1], [0], [0], [1], [0, 0, 1, 1], [], []>} : vector<8x256xbf16>, vector<256x256xbf16>, vector<8x256xf32> -> vector<8x256xf32>
    %c0_48 = arith.constant 0 : index
    %c0_49 = arith.constant 0 : index
    %97 = vector.load %arg14[%c0_48, %c0_49] : memref<1x256xf32, #tpu.memory_space<vmem>>, vector<1x256xf32>
    %98 = vector.broadcast %97 : vector<1x256xf32> to vector<8x256xf32>
    %99 = arith.addf %96, %98 : vector<8x256xf32>
    %cst_50 = arith.constant 0.000000e+00 : f32
    %100 = vector.broadcast %cst_50 : f32 to vector<8x256xf32>
    %101 = arith.maximumf %99, %100 : vector<8x256xf32>
    %cst_51 = arith.constant dense<0.000000e+00> : vector<256xf32>
    %102 = vector.multi_reduction <add>, %101, %cst_51 [0] : vector<8x256xf32> to vector<256xf32>
    %103 = vector.shape_cast %102 : vector<256xf32> to vector<1x256xf32>
    %cst_52 = arith.constant 8.000000e+00 : f32
    %104 = vector.broadcast %cst_52 : f32 to vector<1x256xf32>
    %105 = arith.divf %103, %104 : vector<1x256xf32>
    %106 = arith.mulf %101, %101 : vector<8x256xf32>
    %cst_53 = arith.constant dense<0.000000e+00> : vector<256xf32>
    %107 = vector.multi_reduction <add>, %106, %cst_53 [0] : vector<8x256xf32> to vector<256xf32>
    %108 = vector.shape_cast %107 : vector<256xf32> to vector<1x256xf32>
    %cst_54 = arith.constant 8.000000e+00 : f32
    %109 = vector.broadcast %cst_54 : f32 to vector<1x256xf32>
    %110 = arith.divf %108, %109 : vector<1x256xf32>
    %111 = arith.mulf %105, %105 : vector<1x256xf32>
    %112 = arith.subf %110, %111 : vector<1x256xf32>
    %c0_55 = arith.constant 0 : index
    %c0_56 = arith.constant 0 : index
    %113 = vector.load %arg15[%c0_55, %c0_56] : memref<1x256xf32, #tpu.memory_space<vmem>>, vector<1x256xf32>
    %cst_57 = arith.constant 9.99999974E-6 : f32
    %114 = vector.broadcast %cst_57 : f32 to vector<1x256xf32>
    %115 = arith.addf %112, %114 : vector<1x256xf32>
    %116 = math.rsqrt %115 : vector<1x256xf32>
    %117 = arith.mulf %113, %116 : vector<1x256xf32>
    %c0_58 = arith.constant 0 : index
    %c0_59 = arith.constant 0 : index
    %118 = vector.load %arg16[%c0_58, %c0_59] : memref<1x256xf32, #tpu.memory_space<vmem>>, vector<1x256xf32>
    %119 = arith.mulf %105, %117 : vector<1x256xf32>
    %120 = arith.subf %118, %119 : vector<1x256xf32>
    %121 = vector.broadcast %117 : vector<1x256xf32> to vector<8x256xf32>
    %122 = arith.mulf %101, %121 : vector<8x256xf32>
    %123 = vector.broadcast %120 : vector<1x256xf32> to vector<8x256xf32>
    %124 = arith.addf %122, %123 : vector<8x256xf32>
    %125 = arith.truncf %124 : vector<8x256xf32> to vector<8x256xbf16>
    %c0_60 = arith.constant 0 : index
    %c0_61 = arith.constant 0 : index
    %126 = vector.load %arg17[%c0_60, %c0_61] : memref<256x128xbf16, #tpu.memory_space<vmem>>, vector<256x128xbf16>
    %cst_62 = arith.constant dense<0.000000e+00> : vector<8x128xf32>
    %127 = tpu.matmul %125, %126, %cst_62 {dimension_numbers = #tpu.dot_dimension_numbers<[1], [0], [0], [1], [0, 0, 1, 1], [], []>} : vector<8x256xbf16>, vector<256x128xbf16>, vector<8x128xf32> -> vector<8x128xf32>
    %c0_63 = arith.constant 0 : index
    %c0_64 = arith.constant 0 : index
    %128 = vector.load %arg18[%c0_63, %c0_64] : memref<1x128xf32, #tpu.memory_space<vmem>>, vector<1x128xf32>
    %129 = vector.broadcast %128 : vector<1x128xf32> to vector<8x128xf32>
    %130 = arith.addf %127, %129 : vector<8x128xf32>
    %c0_65 = arith.constant 0 : index
    %c0_66 = arith.constant 0 : index
    %131 = vector.load %arg19[%c0_65, %c0_66] : memref<8x128xf32, #tpu.memory_space<vmem>>, vector<8x128xf32>
    tpu.vector_store %arg19[%c0_65, %c0_66], %130 {strides = array<i32>} : memref<8x128xf32, #tpu.memory_space<vmem>>, vector<8x128xf32>,
    return
  }
}

</mosaic_0001>

<llo_original>
// kernel: tpu_custom_call.1
$region0: #{tpu_custom_call.1}
  #allocation0 [shape = 'u32[]', space=smem, size = 0x4, offset = 0x4, fixed_abs, tag = 'smem constant byte address 0x4 - core index']
  #allocation1 [shape = 'u32[144,128]{1,0:T(1,128)}', space=vmem, size = 0x12000, scoped, tag = 'internal scratch']
  %s0 = inlined_call_operand.hbm [shape: f32[8,128], index: 0, kind: input, shape index: {}]
  %s1 = inlined_call_operand.hbm [shape: bf16[128,512], index: 1, kind: input, shape index: {}]
  %s2 = inlined_call_operand.vmem [shape: f32[1,512], index: 2, kind: input, shape index: {}]
  %s3 = inlined_call_operand.vmem [shape: f32[1,512], index: 3, kind: input, shape index: {}]
  %s4 = inlined_call_operand.vmem [shape: f32[1,512], index: 4, kind: input, shape index: {}]
  %s5 = inlined_call_operand.hbm [shape: bf16[512,512], index: 5, kind: input, shape index: {}]
  %s6 = inlined_call_operand.vmem [shape: f32[1,512], index: 6, kind: input, shape index: {}]
  %s7 = inlined_call_operand.vmem [shape: f32[1,512], index: 7, kind: input, shape index: {}]
  %s8 = inlined_call_operand.vmem [shape: f32[1,512], index: 8, kind: input, shape index: {}]
  %s9 = inlined_call_operand.hbm [shape: bf16[512,256], index: 9, kind: input, shape index: {}]
  %s10 = inlined_call_operand.vmem [shape: f32[1,256], index: 10, kind: input, shape index: {}]
  %s11 = inlined_call_operand.vmem [shape: f32[1,256], index: 11, kind: input, shape index: {}]
  %s12 = inlined_call_operand.vmem [shape: f32[1,256], index: 12, kind: input, shape index: {}]
  %s13 = inlined_call_operand.hbm [shape: bf16[256,256], index: 13, kind: input, shape index: {}]
  %s14 = inlined_call_operand.vmem [shape: f32[1,256], index: 14, kind: input, shape index: {}]
  %s15 = inlined_call_operand.vmem [shape: f32[1,256], index: 15, kind: input, shape index: {}]
  %s16 = inlined_call_operand.vmem [shape: f32[1,256], index: 16, kind: input, shape index: {}]
  %s17 = inlined_call_operand.hbm [shape: bf16[256,128], index: 17, kind: input, shape index: {}]
  %s18 = inlined_call_operand.vmem [shape: f32[1,128], index: 18, kind: input, shape index: {}]
  %s19 = inlined_call_operand.hbm [shape: f32[8,128], index: 19, kind: output, shape index: {}]
  %s20 = sld [smem:[#allocation0]]
  $region110: #{tpu_custom_call.1} parent=0
    _
  %s22 = ssub.s32 1, %s20
  %s23 = scalar_select 0, %s22, %s20
  $region1: #{tpu_custom_call.1} parent=0
    #allocation2 [shape = 'u8[4096]{0}', space=vmem, size = 0x1000, scoped, tag = 'input window, operand 0, single buffered']
    #allocation3 [shape = 's32[1]{0}', space=sflag, size = 0x4, scoped, tag = 'scoped memory for tpu_custom_call.1']
    #allocation4 [shape = 's32[1]{0}', space=sflag, size = 0x4, scoped, tag = 'scoped memory for tpu_custom_call.1']
    #allocation5 [shape = 'u8[131072]{0}', space=vmem, size = 0x20000, scoped, tag = 'input window, operand 1, single buffered']
    #allocation6 [shape = 's32[1]{0}', space=sflag, size = 0x4, scoped, tag = 'scoped memory for tpu_custom_call.1']
    #allocation7 [shape = 'u8[524288]{0}', space=vmem, size = 0x80000, scoped, tag = 'input window, operand 5, single buffered']
    #allocation8 [shape = 'u8[262144]{0}', space=vmem, size = 0x40000, scoped, tag = 'input window, operand 9, single buffered']
    #allocation9 [shape = 's32[1]{0}', space=sflag, size = 0x4, scoped, tag = 'scoped memory for tpu_custom_call.1']
    #allocation10 [shape = 'u8[131072]{0}', space=vmem, size = 0x20000, scoped, tag = 'input window, operand 13, single buffered']
    #allocation11 [shape = 'u8[65536]{0}', space=vmem, size = 0x10000, scoped, tag = 'input window, operand 17, single buffered']
    #allocation12 [shape = 's32[1]{0}', space=sflag, size = 0x4, scoped, tag = 'scoped memory for tpu_custom_call.1']
    #allocation13 [shape = 'u8[4096]{0}', space=vmem, size = 0x1000, scoped, tag = 'output window, operand 0, single buffered']
    %24 = vsyncpa [#allocation3], 0
    %25 = vsyncpa [#allocation6], 0
    %26 = vsyncpa [#allocation9], 0
    %27 = vsyncpa [#allocation12], 0
    %28 = vsyncpa [#allocation4], 0
    // Predicated region
    $region2: #{tpu_custom_call.1} parent=1 // pred_check
      _
    $region3: #{tpu_custom_call.1} parent=1 // pred_check_branch
      %30 = sbr.rel (0) target = $region5
    $region4: #{tpu_custom_call.1} parent=1 // pred_region
      %s32 = ssub.s32 128, 128
      %33 = vsyncadd [#allocation3], %s32
      %s35 = sshll.u32 [#allocation2], 4
      %s36 = int_to_ptr.vmem [resolvable:$true] %s35
      %38 = dma.hbm_to_vmem [thread:$0]  %s0, 128, %s36, [#allocation3]
    $region5: #{tpu_custom_call.1} parent=1 // pred_fallthru
      _
    // Predicated region
    $region6: #{tpu_custom_call.1} parent=1 // pred_check
      _
    $region7: #{tpu_custom_call.1} parent=1 // pred_check_branch
      %40 = sbr.rel (0) target = $region9
    $region8: #{tpu_custom_call.1} parent=1 // pred_region
      %s42 = ssub.s32 4096, 4096
      %43 = vsyncadd [#allocation6], %s42
      %s44 = sshll.u32 [#allocation5], 4
      %s45 = int_to_ptr.vmem [resolvable:$true] %s44
      %50 = dma.hbm_to_vmem [thread:$0]  %s1, 4096, %s45, [#allocation6], 256, 256, 16
    $region9: #{tpu_custom_call.1} parent=1 // pred_fallthru
      _
    // Predicated region
    $region10: #{tpu_custom_call.1} parent=1 // pred_check
      _
    $region11: #{tpu_custom_call.1} parent=1 // pred_check_branch
      %52 = sbr.rel (0) target = $region13
    $region12: #{tpu_custom_call.1} parent=1 // pred_region
      _
    $region13: #{tpu_custom_call.1} parent=1 // pred_fallthru
      _
    // Predicated region
    $region14: #{tpu_custom_call.1} parent=1 // pred_check
      _
    $region15: #{tpu_custom_call.1} parent=1 // pred_check_branch
      %54 = sbr.rel (0) target = $region17
    $region16: #{tpu_custom_call.1} parent=1 // pred_region
      _
    $region17: #{tpu_custom_call.1} parent=1 // pred_fallthru
      _
    // Predicated region
    $region18: #{tpu_custom_call.1} parent=1 // pred_check
      _
    $region19: #{tpu_custom_call.1} parent=1 // pred_check_branch
      %56 = sbr.rel (0) target = $region21
    $region20: #{tpu_custom_call.1} parent=1 // pred_region
      _
    $region21: #{tpu_custom_call.1} parent=1 // pred_fallthru
      _
    // Predicated region
    $region22: #{tpu_custom_call.1} parent=1 // pred_check
      _
    $region23: #{tpu_custom_call.1} parent=1 // pred_check_branch
      %58 = sbr.rel (0) target = $region25
    $region24: #{tpu_custom_call.1} parent=1 // pred_region
      %s60 = ssub.s32 16384, 16384
      %61 = vsyncadd [#allocation6], %s60
      %s62 = sshll.u32 [#allocation7], 4
      %s63 = int_to_ptr.vmem [resolvable:$true] %s62
      %68 = dma.hbm_to_vmem [thread:$0]  %s5, 16384, %s63, [#allocation6], 256, 256, 16
    $region25: #{tpu_custom_call.1} parent=1 // pred_fallthru
      _
    // Predicated region
    $region26: #{tpu_custom_call.1} parent=1 // pred_check
      _
    $region27: #{tpu_custom_call.1} parent=1 // pred_check_branch
      %70 = sbr.rel (0) target = $region29
    $region28: #{tpu_custom_call.1} parent=1 // pred_region
      _
    $region29: #{tpu_custom_call.1} parent=1 // pred_fallthru
      _
    // Predicated region
    $region30: #{tpu_custom_call.1} parent=1 // pred_check
      _
    $region31: #{tpu_custom_call.1} parent=1 // pred_check_branch
      %72 = sbr.rel (0) target = $region33
    $region32: #{tpu_custom_call.1} parent=1 // pred_region
      _
    $region33: #{tpu_custom_call.1} parent=1 // pred_fallthru
      _
    // Predicated region
    $region34: #{tpu_custom_call.1} parent=1 // pred_check
      _
    $region35: #{tpu_custom_call.1} parent=1 // pred_check_branch
      %74 = sbr.rel (0) target = $region37
    $region36: #{tpu_custom_call.1} parent=1 // pred_region
      _
    $region37: #{tpu_custom_call.1} parent=1 // pred_fallthru
      _
    // Predicated region
    $region38: #{tpu_custom_call.1} parent=1 // pred_check
      _
    $region39: #{tpu_custom_call.1} parent=1 // pred_check_branch
      %76 = sbr.rel (0) target = $region41
    $region40: #{tpu_custom_call.1} parent=1 // pred_region
      %s78 = ssub.s32 8192, 8192
      %79 = vsyncadd [#allocation9], %s78
      %s80 = sshll.u32 [#allocation8], 4
      %s81 = int_to_ptr.vmem [resolvable:$true] %s80
      %86 = dma.hbm_to_vmem [thread:$0]  %s9, 8192, %s81, [#allocation9], 128, 128, 8
    $region41: #{tpu_custom_call.1} parent=1 // pred_fallthru
      _
    // Predicated region
    $region42: #{tpu_custom_call.1} parent=1 // pred_check
      _
    $region43: #{tpu_custom_call.1} parent=1 // pred_check_branch
      %88 = sbr.rel (0) target = $region45
    $region44: #{tpu_custom_call.1} parent=1 // pred_region
      _
    $region45: #{tpu_custom_call.1} parent=1 // pred_fallthru
      _
    // Predicated region
    $region46: #{tpu_custom_call.1} parent=1 // pred_check
      _
    $region47: #{tpu_custom_call.1} parent=1 // pred_check_branch
      %90 = sbr.rel (0) target = $region49
    $region48: #{tpu_custom_call.1} parent=1 // pred_region
      _
    $region49: #{tpu_custom_call.1} parent=1 // pred_fallthru
      _
    // Predicated region
    $region50: #{tpu_custom_call.1} parent=1 // pred_check
      _
    $region51: #{tpu_custom_call.1} parent=1 // pred_check_branch
      %92 = sbr.rel (0) target = $region53
    $region52: #{tpu_custom_call.1} parent=1 // pred_region
      _
    $region53: #{tpu_custom_call.1} parent=1 // pred_fallthru
      _
    // Predicated region
    $region54: #{tpu_custom_call.1} parent=1 // pred_check
      _
    $region55: #{tpu_custom_call.1} parent=1 // pred_check_branch
      %94 = sbr.rel (0) target = $region57
    $region56: #{tpu_custom_call.1} parent=1 // pred_region
      %s96 = ssub.s32 4096, 4096
      %97 = vsyncadd [#allocation9], %s96
      %s98 = sshll.u32 [#allocation10], 4
      %s99 = int_to_ptr.vmem [resolvable:$true] %s98
      %104 = dma.hbm_to_vmem [thread:$0]  %s13, 4096, %s99, [#allocation9], 128, 128, 8
    $region57: #{tpu_custom_call.1} parent=1 // pred_fallthru
      _
    // Predicated region
    $region58: #{tpu_custom_call.1} parent=1 // pred_check
      _
    $region59: #{tpu_custom_call.1} parent=1 // pred_check_branch
      %106 = sbr.rel (0) target = $region61
    $region60: #{tpu_custom_call.1} parent=1 // pred_region
      _
    $region61: #{tpu_custom_call.1} parent=1 // pred_fallthru
      _
    // Predicated region
    $region62: #{tpu_custom_call.1} parent=1 // pred_check
      _
    $region63: #{tpu_custom_call.1} parent=1 // pred_check_branch
      %108 = sbr.rel (0) target = $region65
    $region64: #{tpu_custom_call.1} parent=1 // pred_region
      _
    $region65: #{tpu_custom_call.1} parent=1 // pred_fallthru
      _
    // Predicated region
    $region66: #{tpu_custom_call.1} parent=1 // pred_check
      _
    $region67: #{tpu_custom_call.1} parent=1 // pred_check_branch
      %110 = sbr.rel (0) target = $region69
    $region68: #{tpu_custom_call.1} parent=1 // pred_region
      _
    $region69: #{tpu_custom_call.1} parent=1 // pred_fallthru
      _
    // Predicated region
    $region70: #{tpu_custom_call.1} parent=1 // pred_check
      _
    $region71: #{tpu_custom_call.1} parent=1 // pred_check_branch
      %112 = sbr.rel (0) target = $region73
    $region72: #{tpu_custom_call.1} parent=1 // pred_region
      %s114 = ssub.s32 2048, 2048
      %115 = vsyncadd [#allocation12], %s114
      %s116 = sshll.u32 [#allocation11], 4
      %s117 = int_to_ptr.vmem [resolvable:$true] %s116
      %122 = dma.hbm_to_vmem [thread:$0]  %s17, 2048, %s117, [#allocation12], 64, 64, 4
    $region73: #{tpu_custom_call.1} parent=1 // pred_fallthru
      _
    // Predicated region
    $region74: #{tpu_custom_call.1} parent=1 // pred_check
      _
    $region75: #{tpu_custom_call.1} parent=1 // pred_check_branch
      %124 = sbr.rel (0) target = $region77
    $region76: #{tpu_custom_call.1} parent=1 // pred_region
      _
    $region77: #{tpu_custom_call.1} parent=1 // pred_fallthru
      _
    // Predicated region
    $region78: #{tpu_custom_call.1} parent=1 // pred_check
      _
    $region79: #{tpu_custom_call.1} parent=1 // pred_check_branch
      %126 = sbr.rel (0) target = $region81
    $region80: #{tpu_custom_call.1} parent=1 // pred_region
      %127 = dma.done [#allocation3], 128
    $region81: #{tpu_custom_call.1} parent=1 // pred_fallthru
      _
    // Predicated region
    $region82: #{tpu_custom_call.1} parent=1 // pred_check
      _
    $region83: #{tpu_custom_call.1} parent=1 // pred_check_branch
      %129 = sbr.rel (0) target = $region85
    $region84: #{tpu_custom_call.1} parent=1 // pred_region
      %130 = dma.done [#allocation6], 4096
    $region85: #{tpu_custom_call.1} parent=1 // pred_fallthru
      _
    // Predicated region
    $region86: #{tpu_custom_call.1} parent=1 // pred_check
      _
    $region87: #{tpu_custom_call.1} parent=1 // pred_check_branch
      %132 = sbr.rel (0) target = $region89
    $region88: #{tpu_custom_call.1} parent=1 // pred_region
      %133 = dma.done [#allocation6], 16384
    $region89: #{tpu_custom_call.1} parent=1 // pred_fallthru
      _
    // Predicated region
    $region90: #{tpu_custom_call.1} parent=1 // pred_check
      _
    $region91: #{tpu_custom_call.1} parent=1 // pred_check_branch
      %135 = sbr.rel (0) target = $region93
    $region92: #{tpu_custom_call.1} parent=1 // pred_region
      %136 = dma.done [#allocation9], 8192
    $region93: #{tpu_custom_call.1} parent=1 // pred_fallthru
      _
    // Predicated region
    $region94: #{tpu_custom_call.1} parent=1 // pred_check
      _
    $region95: #{tpu_custom_call.1} parent=1 // pred_check_branch
      %138 = sbr.rel (0) target = $region97
    $region96: #{tpu_custom_call.1} parent=1 // pred_region
      %139 = dma.done [#allocation9], 4096
    $region97: #{tpu_custom_call.1} parent=1 // pred_fallthru
      _
    // Predicated region
    $region98: #{tpu_custom_call.1} parent=1 // pred_check
      _
    $region99: #{tpu_custom_call.1} parent=1 // pred_check_branch
      %141 = sbr.rel (0) target = $region101
    $region100: #{tpu_custom_call.1} parent=1 // pred_region
      %142 = dma.done [#allocation12], 2048
    $region101: #{tpu_custom_call.1} parent=1 // pred_fallthru
      _
    %v144 = vld [vmem:[#allocation2] sm:$0xff]
    %v145 = vpack.c.bf16 %v144, %v144
    %v146 = vld [vmem:[#allocation5] sm:$0xff]
    %v147 = vld [vmem:[#allocation5 + $0x8] sm:$0xff]
    %v148 = vld [vmem:[#allocation5 + $0x10] sm:$0xff]
    %v149 = vld [vmem:[#allocation5 + $0x18] sm:$0xff]
    %v150 = vld [vmem:[#allocation5 + $0x20] sm:$0xff]
    %v151 = vld [vmem:[#allocation5 + $0x28] sm:$0xff]
    %v152 = vld [vmem:[#allocation5 + $0x30] sm:$0xff]
    %v153 = vld [vmem:[#allocation5 + $0x38] sm:$0xff]
    %v154 = vld [vmem:[#allocation5 + $0x40] sm:$0xff]
    %v155 = vld [vmem:[#allocation5 + $0x48] sm:$0xff]
    %v156 = vld [vmem:[#allocation5 + $0x50] sm:$0xff]
    %v157 = vld [vmem:[#allocation5 + $0x58] sm:$0xff]
    %v158 = vld [vmem:[#allocation5 + $0x60] sm:$0xff]
    %v159 = vld [vmem:[#allocation5 + $0x68] sm:$0xff]
    %v160 = vld [vmem:[#allocation5 + $0x70] sm:$0xff]
    %v161 = vld [vmem:[#allocation5 + $0x78] sm:$0xff]
    %v162 = vld [vmem:[#allocation5 + $0x80] sm:$0xff]
    %v163 = vld [vmem:[#allocation5 + $0x88] sm:$0xff]
    %v164 = vld [vmem:[#allocation5 + $0x90] sm:$0xff]
    %v165 = vld [vmem:[#allocation5 + $0x98] sm:$0xff]
    %v166 = vld [vmem:[#allocation5 + $0xa0] sm:$0xff]
    %v167 = vld [vmem:[#allocation5 + $0xa8] sm:$0xff]
    %v168 = vld [vmem:[#allocation5 + $0xb0] sm:$0xff]
    %v169 = vld [vmem:[#allocation5 + $0xb8] sm:$0xff]
    %v170 = vld [vmem:[#allocation5 + $0xc0] sm:$0xff]
    %v171 = vld [vmem:[#allocation5 + $0xc8] sm:$0xff]
    %v172 = vld [vmem:[#allocation5 + $0xd0] sm:$0xff]
    %v173 = vld [vmem:[#allocation5 + $0xd8] sm:$0xff]
    %v174 = vld [vmem:[#allocation5 + $0xe0] sm:$0xff]
    %v175 = vld [vmem:[#allocation5 + $0xe8] sm:$0xff]
    %v176 = vld [vmem:[#allocation5 + $0xf0] sm:$0xff]
    %v177 = vld [vmem:[#allocation5 + $0xf8] sm:$0xff]
    %v178 = vld [vmem:[%s2] sm:$0xf]
    %v180 = vlaneseq
    %v181 = vshrl.u32 %v180, 7
    %v182 = vsub.s32 0, %v181
    %v183 = vrot.slane %v178, %v182
    %v184 = vlaneseq
    %v185 = vshrl.u32 %v184, 7
    %v186 = vsub.s32 1, %v185
    %v187 = vrot.slane %v178, %v186
    %v188 = vlaneseq
    %v189 = vshrl.u32 %v188, 7
    %v190 = vsub.s32 2, %v189
    %v191 = vrot.slane %v178, %v190
    %v192 = vlaneseq
    %v193 = vshrl.u32 %v192, 7
    %v194 = vsub.s32 3, %v193
    %v195 = vrot.slane %v178, %v194
    %v232 = vunpack.c.l.b16 %v146
    %v233 = vunpack.c.h.b16 %v146
    %v234 = vunpack.c.l.b16 %v147
    %v235 = vunpack.c.h.b16 %v147
    %v236 = vunpack.c.l.b16 %v148
    %v237 = vunpack.c.h.b16 %v148
    %v238 = vunpack.c.l.b16 %v149
    %v239 = vunpack.c.h.b16 %v149
    %v240 = vunpack.c.l.b16 %v150
    %v241 = vunpack.c.h.b16 %v150
    %v242 = vunpack.c.l.b16 %v151
    %v243 = vunpack.c.h.b16 %v151
    %v244 = vunpack.c.l.b16 %v152
    %v245 = vunpack.c.h.b16 %v152
    %v246 = vunpack.c.l.b16 %v153
    %v247 = vunpack.c.h.b16 %v153
    %v248 = vunpack.c.l.b16 %v154
    %v249 = vunpack.c.h.b16 %v154
    %v250 = vunpack.c.l.b16 %v155
    %v251 = vunpack.c.h.b16 %v155
    %v252 = vunpack.c.l.b16 %v156
    %v253 = vunpack.c.h.b16 %v156
    %v254 = vunpack.c.l.b16 %v157
    %v255 = vunpack.c.h.b16 %v157
    %v256 = vunpack.c.l.b16 %v158
    %v257 = vunpack.c.h.b16 %v158
    %v258 = vunpack.c.l.b16 %v159
    %v259 = vunpack.c.h.b16 %v159
    %v260 = vunpack.c.l.b16 %v160
    %v261 = vunpack.c.h.b16 %v160
    %v262 = vunpack.c.l.b16 %v161
    %v263 = vunpack.c.h.b16 %v161
    %v264 = vunpack.c.l.b16 %v162
    %v265 = vunpack.c.h.b16 %v162
    %v266 = vunpack.c.l.b16 %v163
    %v267 = vunpack.c.h.b16 %v163
    %v268 = vunpack.c.l.b16 %v164
    %v269 = vunpack.c.h.b16 %v164
    %v270 = vunpack.c.l.b16 %v165
    %v271 = vunpack.c.h.b16 %v165
    %v272 = vunpack.c.l.b16 %v166
    %v273 = vunpack.c.h.b16 %v166
    %v274 = vunpack.c.l.b16 %v167
    %v275 = vunpack.c.h.b16 %v167
    %v276 = vunpack.c.l.b16 %v168
    %v277 = vunpack.c.h.b16 %v168
    %v278 = vunpack.c.l.b16 %v169
    %v279 = vunpack.c.h.b16 %v169
    %v280 = vunpack.c.l.b16 %v170
    %v281 = vunpack.c.h.b16 %v170
    %v282 = vunpack.c.l.b16 %v171
    %v283 = vunpack.c.h.b16 %v171
    %v284 = vunpack.c.l.b16 %v172
    %v285 = vunpack.c.h.b16 %v172
    %v286 = vunpack.c.l.b16 %v173
    %v287 = vunpack.c.h.b16 %v173
    %v288 = vunpack.c.l.b16 %v174
    %v289 = vunpack.c.h.b16 %v174
    %v290 = vunpack.c.l.b16 %v175
    %v291 = vunpack.c.h.b16 %v175
    %v292 = vunpack.c.l.b16 %v176
    %v293 = vunpack.c.h.b16 %v176
    %v294 = vunpack.c.l.b16 %v177
    %v295 = vunpack.c.h.b16 %v177
    %v296 = vpack.c.b16 %v236, %v232
    %v297 = vpack.c.b16 %v237, %v233
    %v298 = vpack.c.b16 %v238, %v234
    %v299 = vpack.c.b16 %v239, %v235
    %v300 = vpack.c.b16 %v244, %v240
    %v301 = vpack.c.b16 %v245, %v241
    %v302 = vpack.c.b16 %v246, %v242
    %v303 = vpack.c.b16 %v247, %v243
    %v304 = vpack.c.b16 %v252, %v248
    %v305 = vpack.c.b16 %v253, %v249
    %v306 = vpack.c.b16 %v254, %v250
    %v307 = vpack.c.b16 %v255, %v251
    %v308 = vpack.c.b16 %v260, %v256
    %v309 = vpack.c.b16 %v261, %v257
    %v310 = vpack.c.b16 %v262, %v258
    %v311 = vpack.c.b16 %v263, %v259
    %v312 = vpack.c.b16 %v268, %v264
    %v313 = vpack.c.b16 %v269, %v265
    %v314 = vpack.c.b16 %v270, %v266
    %v315 = vpack.c.b16 %v271, %v267
    %v316 = vpack.c.b16 %v276, %v272
    %v317 = vpack.c.b16 %v277, %v273
    %v318 = vpack.c.b16 %v278, %v274
    %v319 = vpack.c.b16 %v279, %v275
    %v320 = vpack.c.b16 %v284, %v280
    %v321 = vpack.c.b16 %v285, %v281
    %v322 = vpack.c.b16 %v286, %v282
    %v323 = vpack.c.b16 %v287, %v283
    %v324 = vpack.c.b16 %v292, %v288
    %v325 = vpack.c.b16 %v293, %v289
    %v326 = vpack.c.b16 %v294, %v290
    %v327 = vpack.c.b16 %v295, %v291
    %360 = vmatprep.subr.bf16.mxu0 %v297
    %361 = vmatpush1.bf16.msra.mxu0 %v296
    %362 = vmatprep.subr.bf16.mxu0 %v301
    %363 = vmatpush1.bf16.msra.mxu0 %v300
    %364 = vmatprep.subr.bf16.mxu0 %v305
    %365 = vmatpush1.bf16.msra.mxu0 %v304
    %366 = vmatprep.subr.bf16.mxu0 %v309
    %367 = vmatpush1.bf16.msra.mxu0 %v308
    %368 = vmatprep.subr.bf16.mxu0 %v313
    %369 = vmatpush1.bf16.msra.mxu0 %v312
    %370 = vmatprep.subr.bf16.mxu0 %v317
    %371 = vmatpush1.bf16.msra.mxu0 %v316
    %372 = vmatprep.subr.bf16.mxu0 %v321
    %373 = vmatpush1.bf16.msra.mxu0 %v320
    %374 = vmatprep.subr.bf16.mxu0 %v325
    %375 = vmatpush1.bf16.msra.mxu0 %v324
    %376 = vmatprep.subr.bf16.mxu0 0
    %377 = vmatpush1.bf16.msra.mxu0 0
    %378 = vmatprep.subr.bf16.mxu0 0
    %379 = vmatpush1.bf16.msra.mxu0 0
    %380 = vmatprep.subr.bf16.mxu0 0
    %381 = vmatpush1.bf16.msra.mxu0 0
    %382 = vmatprep.subr.bf16.mxu0 0
    %383 = vmatpush1.bf16.msra.mxu0 0
    %384 = vmatprep.subr.bf16.mxu0 0
    %385 = vmatpush1.bf16.msra.mxu0 0
    %386 = vmatprep.subr.bf16.mxu0 0
    %387 = vmatpush1.bf16.msra.mxu0 0
    %388 = vmatprep.subr.bf16.mxu0 0
    %389 = vmatpush1.bf16.msra.mxu0 0
    %390 = vmatprep.subr.bf16.mxu0 0
    %391 = vmatpush1.bf16.msra.mxu0 0
    %392 = vmatprep.mubr.bf16.mxu0 0
    %393 = vmatmul.mubr.bf16.gmra.mrb[0].mxu0 %v145
    %v394 = vpop.f32.mrb[0].mxu0
    %v395 = vadd.f32 %v183, %v394
    %v396 = vpop.f32.mrb[0].mxu0
    %v397 = vadd.f32 %v187, %v396
    %v398 = vpop.f32.mrb[0].mxu0
    %v399 = vpop.f32.mrb[0].mxu0
    %400 = vdwg.mxu0
    %401 = vmatprep.subr.bf16.mxu0 %v299
    %402 = vmatpush1.bf16.msra.mxu0 %v298
    %403 = vmatprep.subr.bf16.mxu0 %v303
    %404 = vmatpush1.bf16.msra.mxu0 %v302
    %405 = vmatprep.subr.bf16.mxu0 %v307
    %406 = vmatpush1.bf16.msra.mxu0 %v306
    %407 = vmatprep.subr.bf16.mxu0 %v311
    %408 = vmatpush1.bf16.msra.mxu0 %v310
    %409 = vmatprep.subr.bf16.mxu0 %v315
    %410 = vmatpush1.bf16.msra.mxu0 %v314
    %411 = vmatprep.subr.bf16.mxu0 %v319
    %412 = vmatpush1.bf16.msra.mxu0 %v318
    %413 = vmatprep.subr.bf16.mxu0 %v323
    %414 = vmatpush1.bf16.msra.mxu0 %v322
    %415 = vmatprep.subr.bf16.mxu0 %v327
    %416 = vmatpush1.bf16.msra.mxu0 %v326
    %417 = vmatprep.subr.bf16.mxu0 0
    %418 = vmatpush1.bf16.msra.mxu0 0
    %419 = vmatprep.subr.bf16.mxu0 0
    %420 = vmatpush1.bf16.msra.mxu0 0
    %421 = vmatprep.subr.bf16.mxu0 0
    %422 = vmatpush1.bf16.msra.mxu0 0
    %423 = vmatprep.subr.bf16.mxu0 0
    %424 = vmatpush1.bf16.msra.mxu0 0
    %425 = vmatprep.subr.bf16.mxu0 0
    %426 = vmatpush1.bf16.msra.mxu0 0
    %427 = vmatprep.subr.bf16.mxu0 0
    %428 = vmatpush1.bf16.msra.mxu0 0
    %429 = vmatprep.subr.bf16.mxu0 0
    %430 = vmatpush1.bf16.msra.mxu0 0
    %431 = vmatprep.subr.bf16.mxu0 0
    %432 = vmatpush1.bf16.msra.mxu0 0
    %433 = vmatprep.mubr.bf16.mxu0 0
    %434 = vmatmul.mubr.bf16.gmra.mrb[0].mxu0 %v145
    %v435 = vpop.f32.mrb[0].mxu0
    %v436 = vadd.f32 %v191, %v435
    %v437 = vpop.f32.mrb[0].mxu0
    %v438 = vadd.f32 %v195, %v437
    %v439 = vpop.f32.mrb[0].mxu0
    %v440 = vpop.f32.mrb[0].mxu0
    %441 = vdwg.mxu0
    %v442 = vmax.f32 %v395, 0.0
    %v443 = vmax.f32 %v397, 0.0
    %v444 = vmax.f32 %v436, 0.0
    %v445 = vmax.f32 %v438, 0.0
    %v446 = vrot.slane %v442, 4
    %v447 = vadd.f32 %v442, %v446
    %v448 = vrot.slane %v447, 2
    %v449 = vadd.f32 %v447, %v448
    %v450 = vrot.slane %v449, 1
    %v451 = vadd.f32 %v449, %v450
    %v452 = vrot.slane %v443, 4
    %v453 = vadd.f32 %v443, %v452
    %v454 = vrot.slane %v453, 2
    %v455 = vadd.f32 %v453, %v454
    %v456 = vrot.slane %v455, 1
    %v457 = vadd.f32 %v455, %v456
    %v458 = vrot.slane %v444, 4
    %v459 = vadd.f32 %v444, %v458
    %v460 = vrot.slane %v459, 2
    %v461 = vadd.f32 %v459, %v460
    %v462 = vrot.slane %v461, 1
    %v463 = vadd.f32 %v461, %v462
    %v464 = vrot.slane %v445, 4
    %v465 = vadd.f32 %v445, %v464
    %v466 = vrot.slane %v465, 2
    %v467 = vadd.f32 %v465, %v466
    %v468 = vrot.slane %v467, 1
    %v469 = vadd.f32 %v467, %v468
    %v470 = vrcp.pop 8.0
    %v471 = vmul.f32 %v451, %v470
    %v472 = vmul.f32 %v457, %v470
    %v473 = vmul.f32 %v463, %v470
    %v474 = vmul.f32 %v469, %v470
    %v475 = vmul.f32 %v442, %v442
    %v476 = vmul.f32 %v443, %v443
    %v477 = vmul.f32 %v444, %v444
    %v478 = vmul.f32 %v445, %v445
    %v479 = vrot.slane %v475, 4
    %v480 = vadd.f32 %v475, %v479
    %v481 = vrot.slane %v480, 2
    %v482 = vadd.f32 %v480, %v481
    %v483 = vrot.slane %v482, 1
    %v484 = vadd.f32 %v482, %v483
    %v485 = vrot.slane %v476, 4
    %v486 = vadd.f32 %v476, %v485
    %v487 = vrot.slane %v486, 2
    %v488 = vadd.f32 %v486, %v487
    %v489 = vrot.slane %v488, 1
    %v490 = vadd.f32 %v488, %v489
    %v491 = vrot.slane %v477, 4
    %v492 = vadd.f32 %v477, %v491
    %v493 = vrot.slane %v492, 2
    %v494 = vadd.f32 %v492, %v493
    %v495 = vrot.slane %v494, 1
    %v496 = vadd.f32 %v494, %v495
    %v497 = vrot.slane %v478, 4
    %v498 = vadd.f32 %v478, %v497
    %v499 = vrot.slane %v498, 2
    %v500 = vadd.f32 %v498, %v499
    %v501 = vrot.slane %v500, 1
    %v502 = vadd.f32 %v500, %v501
    %v503 = vmul.f32 %v484, %v470
    %v504 = vmul.f32 %v490, %v470
    %v505 = vmul.f32 %v496, %v470
    %v506 = vmul.f32 %v502, %v470
    %v507 = vmul.f32 %v471, %v471
    %v508 = vmul.f32 %v472, %v472
    %v509 = vmul.f32 %v473, %v473
    %v510 = vmul.f32 %v474, %v474
    %v511 = vsub.f32 %v503, %v507
    %v512 = vsub.f32 %v504, %v508
    %v513 = vsub.f32 %v505, %v509
    %v514 = vsub.f32 %v506, %v510
    %v515 = vld [vmem:[%s3] sm:$0xf]
    %v516 = vadd.f32 %v511, 1e-05
    %v517 = vadd.f32 %v512, 1e-05
    %v518 = vadd.f32 %v513, 1e-05
    %v519 = vadd.f32 %v514, 1e-05
    %v520 = vrsqrt.pop %v516
    %v521 = vrsqrt.pop %v517
    %v522 = vrsqrt.pop %v518
    %v523 = vrsqrt.pop %v519
    %v528 = vcombine.low %v520, %v521
    %v529 = vcombine.low %v522, %v523
    %v531 = vunpack.c.l.s4 1966171168
    %v532 = vunpack.c.0.s8 %v531
    %v533 = vlaneseq
    %v534 = vshrl.u32 %v533, 7
    %v535 = vsub.s32 %v532, %v534
    %v536 = vrot.slane %v528, %v535
    %v538 = vunpack.c.l.s4 1966171168
    %v539 = vunpack.c.0.s8 %v538
    %v540 = vlaneseq
    %v541 = vshrl.u32 %v540, 7
    %v542 = vsub.s32 %v539, %v541
    %v543 = vrot.slane %v529, %v542
    %v544 = vcombine.low %v536, %v543
    %v546 = vunpack.c.l.s4 1966171168
    %v547 = vunpack.c.0.s8 %v546
    %v548 = vlaneseq
    %v549 = vshrl.u32 %v548, 7
    %v550 = vsub.s32 %v547, %v549
    %v551 = vrot.slane %v544, %v550
    %v553 = vmul.f32 %v515, %v551
    %v554 = vld [vmem:[%s4] sm:$0xf]
    %v556 = vlaneseq
    %v557 = vshrl.u32 %v556, 7
    %v558 = vsub.s32 0, %v557
    %v559 = vrot.slane %v553, %v558
    %v560 = vlaneseq
    %v561 = vshrl.u32 %v560, 7
    %v562 = vsub.s32 1, %v561
    %v563 = vrot.slane %v553, %v562
    %v564 = vlaneseq
    %v565 = vshrl.u32 %v564, 7
    %v566 = vsub.s32 2, %v565
    %v567 = vrot.slane %v553, %v566
    %v568 = vlaneseq
    %v569 = vshrl.u32 %v568, 7
    %v570 = vsub.s32 3, %v569
    %v571 = vrot.slane %v553, %v570
    %v576 = vmul.f32 %v471, %v559
    %v577 = vmul.f32 %v472, %v563
    %v578 = vmul.f32 %v473, %v567
    %v579 = vmul.f32 %v474, %v571
    %v584 = vcombine.low %v576, %v577
    %v585 = vcombine.low %v578, %v579
    %v587 = vunpack.c.l.s4 1966171168
    %v588 = vunpack.c.0.s8 %v587
    %v589 = vlaneseq
    %v590 = vshrl.u32 %v589, 7
    %v591 = vsub.s32 %v588, %v590
    %v592 = vrot.slane %v584, %v591
    %v594 = vunpack.c.l.s4 1966171168
    %v595 = vunpack.c.0.s8 %v594
    %v596 = vlaneseq
    %v597 = vshrl.u32 %v596, 7
    %v598 = vsub.s32 %v595, %v597
    %v599 = vrot.slane %v585, %v598
    %v600 = vcombine.low %v592, %v599
    %v602 = vunpack.c.l.s4 1966171168
    %v603 = vunpack.c.0.s8 %v602
    %v604 = vlaneseq
    %v605 = vshrl.u32 %v604, 7
    %v606 = vsub.s32 %v603, %v605
    %v607 = vrot.slane %v600, %v606
    %v609 = vsub.f32 %v554, %v607
    %v610 = vmul.f32 %v442, %v559
    %v611 = vmul.f32 %v443, %v563
    %v612 = vmul.f32 %v444, %v567
    %v613 = vmul.f32 %v445, %v571
    %v615 = vlaneseq
    %v616 = vshrl.u32 %v615, 7
    %v617 = vsub.s32 0, %v616
    %v618 = vrot.slane %v609, %v617
    %v619 = vlaneseq
    %v620 = vshrl.u32 %v619, 7
    %v621 = vsub.s32 1, %v620
    %v622 = vrot.slane %v609, %v621
    %v623 = vlaneseq
    %v624 = vshrl.u32 %v623, 7
    %v625 = vsub.s32 2, %v624
    %v626 = vrot.slane %v609, %v625
    %v627 = vlaneseq
    %v628 = vshrl.u32 %v627, 7
    %v629 = vsub.s32 3, %v628
    %v630 = vrot.slane %v609, %v629
    %v635 = vadd.f32 %v610, %v618
    %v636 = vadd.f32 %v611, %v622
    %v637 = vadd.f32 %v612, %v626
    %v638 = vadd.f32 %v613, %v630
    %v639 = vpack.c.bf16 %v635, %v635
    %v640 = vpack.c.bf16 %v636, %v636
    %v641 = vpack.c.bf16 %v637, %v637
    %v642 = vpack.c.bf16 %v638, %v638
    %v643 = vld [vmem:[#allocation7] sm:$0xff]
    %v644 = vld [vmem:[#allocation7 + $0x8] sm:$0xff]
    %v645 = vld [vmem:[#allocation7 + $0x10] sm:$0xff]
    %v646 = vld [vmem:[#allocation7 + $0x18] sm:$0xff]
    %v647 = vld [vmem:[#allocation7 + $0x20] sm:$0xff]
    %v648 = vld [vmem:[#allocation7 + $0x28] sm:$0xff]
    %v649 = vld [vmem:[#allocation7 + $0x30] sm:$0xff]
    %v650 = vld [vmem:[#allocation7 + $0x38] sm:$0xff]
    %v651 = vld [vmem:[#allocation7 + $0x40] sm:$0xff]
    %v652 = vld [vmem:[#allocation7 + $0x48] sm:$0xff]
    %v653 = vld [vmem:[#allocation7 + $0x50] sm:$0xff]
    %v654 = vld [vmem:[#allocation7 + $0x58] sm:$0xff]
    %v655 = vld [vmem:[#allocation7 + $0x60] sm:$0xff]
    %v656 = vld [vmem:[#allocation7 + $0x68] sm:$0xff]
    %v657 = vld [vmem:[#allocation7 + $0x70] sm:$0xff]
    %v658 = vld [vmem:[#allocation7 + $0x78] sm:$0xff]
    %v659 = vld [vmem:[#allocation7 + $0x80] sm:$0xff]
    %v660 = vld [vmem:[#allocation7 + $0x88] sm:$0xff]
    %v661 = vld [vmem:[#allocation7 + $0x90] sm:$0xff]
    %v662 = vld [vmem:[#allocation7 + $0x98] sm:$0xff]
    %v663 = vld [vmem:[#allocation7 + $0xa0] sm:$0xff]
    %v664 = vld [vmem:[#allocation7 + $0xa8] sm:$0xff]
    %v665 = vld [vmem:[#allocation7 + $0xb0] sm:$0xff]
    %v666 = vld [vmem:[#allocation7 + $0xb8] sm:$0xff]
    %v667 = vld [vmem:[#allocation7 + $0xc0] sm:$0xff]
    %v668 = vld [vmem:[#allocation7 + $0xc8] sm:$0xff]
    %v669 = vld [vmem:[#allocation7 + $0xd0] sm:$0xff]
    %v670 = vld [vmem:[#allocation7 + $0xd8] sm:$0xff]
    %v671 = vld [vmem:[#allocation7 + $0xe0] sm:$0xff]
    %v672 = vld [vmem:[#allocation7 + $0xe8] sm:$0xff]
    %v673 = vld [vmem:[#allocation7 + $0xf0] sm:$0xff]
    %v674 = vld [vmem:[#allocation7 + $0xf8] sm:$0xff]
    %v675 = vld [vmem:[#allocation7 + $0x100] sm:$0xff]
    %v676 = vld [vmem:[#allocation7 + $0x108] sm:$0xff]
    %v677 = vld [vmem:[#allocation7 + $0x110] sm:$0xff]
    %v678 = vld [vmem:[#allocation7 + $0x118] sm:$0xff]
    %v679 = vld [vmem:[#allocation7 + $0x120] sm:$0xff]
    %v680 = vld [vmem:[#allocation7 + $0x128] sm:$0xff]
    %v681 = vld [vmem:[#allocation7 + $0x130] sm:$0xff]
    %v682 = vld [vmem:[#allocation7 + $0x138] sm:$0xff]
    %v683 = vld [vmem:[#allocation7 + $0x140] sm:$0xff]
    %v684 = vld [vmem:[#allocation7 + $0x148] sm:$0xff]
    %v685 = vld [vmem:[#allocation7 + $0x150] sm:$0xff]
    %v686 = vld [vmem:[#allocation7 + $0x158] sm:$0xff]
    %v687 = vld [vmem:[#allocation7 + $0x160] sm:$0xff]
    %v688 = vld [vmem:[#allocation7 + $0x168] sm:$0xff]
    %v689 = vld [vmem:[#allocation7 + $0x170] sm:$0xff]
    %v690 = vld [vmem:[#allocation7 + $0x178] sm:$0xff]
    %v691 = vld [vmem:[#allocation7 + $0x180] sm:$0xff]
    %v692 = vld [vmem:[#allocation7 + $0x188] sm:$0xff]
    %v693 = vld [vmem:[#allocation7 + $0x190] sm:$0xff]
    %v694 = vld [vmem:[#allocation7 + $0x198] sm:$0xff]
    %v695 = vld [vmem:[#allocation7 + $0x1a0] sm:$0xff]
    %v696 = vld [vmem:[#allocation7 + $0x1a8] sm:$0xff]
    %v697 = vld [vmem:[#allocation7 + $0x1b0] sm:$0xff]
    %v698 = vld [vmem:[#allocation7 + $0x1b8] sm:$0xff]
    %v699 = vld [vmem:[#allocation7 + $0x1c0] sm:$0xff]
    %v700 = vld [vmem:[#allocation7 + $0x1c8] sm:$0xff]
    %v701 = vld [vmem:[#allocation7 + $0x1d0] sm:$0xff]
    %v702 = vld [vmem:[#allocation7 + $0x1d8] sm:$0xff]
    %v703 = vld [vmem:[#allocation7 + $0x1e0] sm:$0xff]
    %v704 = vld [vmem:[#allocation7 + $0x1e8] sm:$0xff]
    %v705 = vld [vmem:[#allocation7 + $0x1f0] sm:$0xff]
    %v706 = vld [vmem:[#allocation7 + $0x1f8] sm:$0xff]
    %v707 = vld [vmem:[#allocation7 + $0x200] sm:$0xff]
    %v708 = vld [vmem:[#allocation7 + $0x208] sm:$0xff]
    %v709 = vld [vmem:[#allocation7 + $0x210] sm:$0xff]
    %v710 = vld [vmem:[#allocation7 + $0x218] sm:$0xff]
    %v711 = vld [vmem:[#allocation7 + $0x220] sm:$0xff]
    %v712 = vld [vmem:[#allocation7 + $0x228] sm:$0xff]
    %v713 = vld [vmem:[#allocation7 + $0x230] sm:$0xff]
    %v714 = vld [vmem:[#allocation7 + $0x238] sm:$0xff]
    %v715 = vld [vmem:[#allocation7 + $0x240] sm:$0xff]
    %v716 = vld [vmem:[#allocation7 + $0x248] sm:$0xff]
    %v717 = vld [vmem:[#allocation7 + $0x250] sm:$0xff]
    %v718 = vld [vmem:[#allocation7 + $0x258] sm:$0xff]
    %v719 = vld [vmem:[#allocation7 + $0x260] sm:$0xff]
    %v720 = vld [vmem:[#allocation7 + $0x268] sm:$0xff]
    %v721 = vld [vmem:[#allocation7 + $0x270] sm:$0xff]
    %v722 = vld [vmem:[#allocation7 + $0x278] sm:$0xff]
    %v723 = vld [vmem:[#allocation7 + $0x280] sm:$0xff]
    %v724 = vld [vmem:[#allocation7 + $0x288] sm:$0xff]
    %v725 = vld [vmem:[#allocation7 + $0x290] sm:$0xff]
    %v726 = vld [vmem:[#allocation7 + $0x298] sm:$0xff]
    %v727 = vld [vmem:[#allocation7 + $0x2a0] sm:$0xff]
    %v728 = vld [vmem:[#allocation7 + $0x2a8] sm:$0xff]
    %v729 = vld [vmem:[#allocation7 + $0x2b0] sm:$0xff]
    %v730 = vld [vmem:[#allocation7 + $0x2b8] sm:$0xff]
    %v731 = vld [vmem:[#allocation7 + $0x2c0] sm:$0xff]
    %v732 = vld [vmem:[#allocation7 + $0x2c8] sm:$0xff]
    %v733 = vld [vmem:[#allocation7 + $0x2d0] sm:$0xff]
    %v734 = vld [vmem:[#allocation7 + $0x2d8] sm:$0xff]
    %v735 = vld [vmem:[#allocation7 + $0x2e0] sm:$0xff]
    %v736 = vld [vmem:[#allocation7 + $0x2e8] sm:$0xff]
    %v737 = vld [vmem:[#allocation7 + $0x2f0] sm:$0xff]
    %v738 = vld [vmem:[#allocation7 + $0x2f8] sm:$0xff]
    %v739 = vld [vmem:[#allocation7 + $0x300] sm:$0xff]
    %v740 = vld [vmem:[#allocation7 + $0x308] sm:$0xff]
    %v741 = vld [vmem:[#allocation7 + $0x310] sm:$0xff]
    %v742 = vld [vmem:[#allocation7 + $0x318] sm:$0xff]
    %v743 = vld [vmem:[#allocation7 + $0x320] sm:$0xff]
    %v744 = vld [vmem:[#allocation7 + $0x328] sm:$0xff]
    %v745 = vld [vmem:[#allocation7 + $0x330] sm:$0xff]
    %v746 = vld [vmem:[#allocation7 + $0x338] sm:$0xff]
    %v747 = vld [vmem:[#allocation7 + $0x340] sm:$0xff]
    %v748 = vld [vmem:[#allocation7 + $0x348] sm:$0xff]
    %v749 = vld [vmem:[#allocation7 + $0x350] sm:$0xff]
    %v750 = vld [vmem:[#allocation7 + $0x358] sm:$0xff]
    %v751 = vld [vmem:[#allocation7 + $0x360] sm:$0xff]
    %v752 = vld [vmem:[#allocation7 + $0x368] sm:$0xff]
    %v753 = vld [vmem:[#allocation7 + $0x370] sm:$0xff]
    %v754 = vld [vmem:[#allocation7 + $0x378] sm:$0xff]
    %v755 = vld [vmem:[#allocation7 + $0x380] sm:$0xff]
    %v756 = vld [vmem:[#allocation7 + $0x388] sm:$0xff]
    %v757 = vld [vmem:[#allocation7 + $0x390] sm:$0xff]
    %v758 = vld [vmem:[#allocation7 + $0x398] sm:$0xff]
    %v759 = vld [vmem:[#allocation7 + $0x3a0] sm:$0xff]
    %v760 = vld [vmem:[#allocation7 + $0x3a8] sm:$0xff]
    %v761 = vld [vmem:[#allocation7 + $0x3b0] sm:$0xff]
    %v762 = vld [vmem:[#allocation7 + $0x3b8] sm:$0xff]
    %v763 = vld [vmem:[#allocation7 + $0x3c0] sm:$0xff]
    %v764 = vld [vmem:[#allocation7 + $0x3c8] sm:$0xff]
    %v765 = vld [vmem:[#allocation7 + $0x3d0] sm:$0xff]
    %v766 = vld [vmem:[#allocation7 + $0x3d8] sm:$0xff]
    %v767 = vld [vmem:[#allocation7 + $0x3e0] sm:$0xff]
    %v768 = vld [vmem:[#allocation7 + $0x3e8] sm:$0xff]
    %v769 = vld [vmem:[#allocation7 + $0x3f0] sm:$0xff]
    %v770 = vld [vmem:[#allocation7 + $0x3f8] sm:$0xff]
    %v771 = vld [vmem:[%s6] sm:$0xf]
    %v773 = vlaneseq
    %v774 = vshrl.u32 %v773, 7
    %v775 = vsub.s32 0, %v774
    %v776 = vrot.slane %v771, %v775
    %v777 = vlaneseq
    %v778 = vshrl.u32 %v777, 7
    %v779 = vsub.s32 1, %v778
    %v780 = vrot.slane %v771, %v779
    %v781 = vlaneseq
    %v782 = vshrl.u32 %v781, 7
    %v783 = vsub.s32 2, %v782
    %v784 = vrot.slane %v771, %v783
    %v785 = vlaneseq
    %v786 = vshrl.u32 %v785, 7
    %v787 = vsub.s32 3, %v786
    %v788 = vrot.slane %v771, %v787
    %v921 = vunpack.c.l.b16 %v643
    %v922 = vunpack.c.h.b16 %v643
    %v923 = vunpack.c.l.b16 %v644
    %v924 = vunpack.c.h.b16 %v644
    %v925 = vunpack.c.l.b16 %v645
    %v926 = vunpack.c.h.b16 %v645
    %v927 = vunpack.c.l.b16 %v646
    %v928 = vunpack.c.h.b16 %v646
    %v929 = vunpack.c.l.b16 %v647
    %v930 = vunpack.c.h.b16 %v647
    %v931 = vunpack.c.l.b16 %v648
    %v932 = vunpack.c.h.b16 %v648
    %v933 = vunpack.c.l.b16 %v649
    %v934 = vunpack.c.h.b16 %v649
    %v935 = vunpack.c.l.b16 %v650
    %v936 = vunpack.c.h.b16 %v650
    %v937 = vunpack.c.l.b16 %v651
    %v938 = vunpack.c.h.b16 %v651
    %v939 = vunpack.c.l.b16 %v652
    %v940 = vunpack.c.h.b16 %v652
    %v941 = vunpack.c.l.b16 %v653
    %v942 = vunpack.c.h.b16 %v653
    %v943 = vunpack.c.l.b16 %v654
    %v944 = vunpack.c.h.b16 %v654
    %v945 = vunpack.c.l.b16 %v655
    %v946 = vunpack.c.h.b16 %v655
    %v947 = vunpack.c.l.b16 %v656
    %v948 = vunpack.c.h.b16 %v656
    %v949 = vunpack.c.l.b16 %v657
    %v950 = vunpack.c.h.b16 %v657
    %v951 = vunpack.c.l.b16 %v658
    %v952 = vunpack.c.h.b16 %v658
    %v953 = vunpack.c.l.b16 %v659
    %v954 = vunpack.c.h.b16 %v659
    %v955 = vunpack.c.l.b16 %v660
    %v956 = vunpack.c.h.b16 %v660
    %v957 = vunpack.c.l.b16 %v661
    %v958 = vunpack.c.h.b16 %v661
    %v959 = vunpack.c.l.b16 %v662
    %v960 = vunpack.c.h.b16 %v662
    %v961 = vunpack.c.l.b16 %v663
    %v962 = vunpack.c.h.b16 %v663
    %v963 = vunpack.c.l.b16 %v664
    %v964 = vunpack.c.h.b16 %v664
    %v965 = vunpack.c.l.b16 %v665
    %v966 = vunpack.c.h.b16 %v665
    %v967 = vunpack.c.l.b16 %v666
    %v968 = vunpack.c.h.b16 %v666
    %v969 = vunpack.c.l.b16 %v667
    %v970 = vunpack.c.h.b16 %v667
    %v971 = vunpack.c.l.b16 %v668
    %v972 = vunpack.c.h.b16 %v668
    %v973 = vunpack.c.l.b16 %v669
    %v974 = vunpack.c.h.b16 %v669
    %v975 = vunpack.c.l.b16 %v670
    %v976 = vunpack.c.h.b16 %v670
    %v977 = vunpack.c.l.b16 %v671
    %v978 = vunpack.c.h.b16 %v671
    %v979 = vunpack.c.l.b16 %v672
    %v980 = vunpack.c.h.b16 %v672
    %v981 = vunpack.c.l.b16 %v673
    %v982 = vunpack.c.h.b16 %v673
    %v983 = vunpack.c.l.b16 %v674
    %v984 = vunpack.c.h.b16 %v674
    %v985 = vunpack.c.l.b16 %v675
    %v986 = vunpack.c.h.b16 %v675
    %v987 = vunpack.c.l.b16 %v676
    %v988 = vunpack.c.h.b16 %v676
    %v989 = vunpack.c.l.b16 %v677
    %v990 = vunpack.c.h.b16 %v677
    %v991 = vunpack.c.l.b16 %v678
    %v992 = vunpack.c.h.b16 %v678
    %v993 = vunpack.c.l.b16 %v679
    %v994 = vunpack.c.h.b16 %v679
    %v995 = vunpack.c.l.b16 %v680
    %v996 = vunpack.c.h.b16 %v680
    %v997 = vunpack.c.l.b16 %v681
    %v998 = vunpack.c.h.b16 %v681
    %v999 = vunpack.c.l.b16 %v682
    %v1000 = vunpack.c.h.b16 %v682
    %v1001 = vunpack.c.l.b16 %v683
    %v1002 = vunpack.c.h.b16 %v683
    %v1003 = vunpack.c.l.b16 %v684
    %v1004 = vunpack.c.h.b16 %v684
    %v1005 = vunpack.c.l.b16 %v685
    %v1006 = vunpack.c.h.b16 %v685
    %v1007 = vunpack.c.l.b16 %v686
    %v1008 = vunpack.c.h.b16 %v686
    %v1009 = vunpack.c.l.b16 %v687
    %v1010 = vunpack.c.h.b16 %v687
    %v1011 = vunpack.c.l.b16 %v688
    %v1012 = vunpack.c.h.b16 %v688
    %v1013 = vunpack.c.l.b16 %v689
    %v1014 = vunpack.c.h.b16 %v689
    %v1015 = vunpack.c.l.b16 %v690
    %v1016 = vunpack.c.h.b16 %v690
    %v1017 = vunpack.c.l.b16 %v691
    %v1018 = vunpack.c.h.b16 %v691
    %v1019 = vunpack.c.l.b16 %v692
    %v1020 = vunpack.c.h.b16 %v692
    %v1021 = vunpack.c.l.b16 %v693
    %v1022 = vunpack.c.h.b16 %v693
    %v1023 = vunpack.c.l.b16 %v694
    %v1024 = vunpack.c.h.b16 %v694
    %v1025 = vunpack.c.l.b16 %v695
    %v1026 = vunpack.c.h.b16 %v695
    %v1027 = vunpack.c.l.b16 %v696
    %v1028 = vunpack.c.h.b16 %v696
    %v1029 = vunpack.c.l.b16 %v697
    %v1030 = vunpack.c.h.b16 %v697
    %v1031 = vunpack.c.l.b16 %v698
    %v1032 = vunpack.c.h.b16 %v698
    %v1033 = vunpack.c.l.b16 %v699
    %v1034 = vunpack.c.h.b16 %v699
    %v1035 = vunpack.c.l.b16 %v700
    %v1036 = vunpack.c.h.b16 %v700
    %v1037 = vunpack.c.l.b16 %v701
    %v1038 = vunpack.c.h.b16 %v701
    %v1039 = vunpack.c.l.b16 %v702
    %v1040 = vunpack.c.h.b16 %v702
    %v1041 = vunpack.c.l.b16 %v703
    %v1042 = vunpack.c.h.b16 %v703
    %v1043 = vunpack.c.l.b16 %v704
    %v1044 = vunpack.c.h.b16 %v704
    %v1045 = vunpack.c.l.b16 %v705
    %v1046 = vunpack.c.h.b16 %v705
    %v1047 = vunpack.c.l.b16 %v706
    %v1048 = vunpack.c.h.b16 %v706
    %v1049 = vunpack.c.l.b16 %v707
    %v1050 = vunpack.c.h.b16 %v707
    %v1051 = vunpack.c.l.b16 %v708
    %v1052 = vunpack.c.h.b16 %v708
    %v1053 = vunpack.c.l.b16 %v709
    %v1054 = vunpack.c.h.b16 %v709
    %v1055 = vunpack.c.l.b16 %v710
    %v1056 = vunpack.c.h.b16 %v710
    %v1057 = vunpack.c.l.b16 %v711
    %v1058 = vunpack.c.h.b16 %v711
    %v1059 = vunpack.c.l.b16 %v712
    %v1060 = vunpack.c.h.b16 %v712
    %v1061 = vunpack.c.l.b16 %v713
    %v1062 = vunpack.c.h.b16 %v713
    %v1063 = vunpack.c.l.b16 %v714
    %v1064 = vunpack.c.h.b16 %v714
    %v1065 = vunpack.c.l.b16 %v715
    %v1066 = vunpack.c.h.b16 %v715
    %v1067 = vunpack.c.l.b16 %v716
    %v1068 = vunpack.c.h.b16 %v716
    %v1069 = vunpack.c.l.b16 %v717
    %v1070 = vunpack.c.h.b16 %v717
    %v1071 = vunpack.c.l.b16 %v718
    %v1072 = vunpack.c.h.b16 %v718
    %v1073 = vunpack.c.l.b16 %v719
    %v1074 = vunpack.c.h.b16 %v719
    %v1075 = vunpack.c.l.b16 %v720
    %v1076 = vunpack.c.h.b16 %v720
    %v1077 = vunpack.c.l.b16 %v721
    %v1078 = vunpack.c.h.b16 %v721
    %v1079 = vunpack.c.l.b16 %v722
    %v1080 = vunpack.c.h.b16 %v722
    %v1081 = vunpack.c.l.b16 %v723
    %v1082 = vunpack.c.h.b16 %v723
    %v1083 = vunpack.c.l.b16 %v724
    %v1084 = vunpack.c.h.b16 %v724
    %v1085 = vunpack.c.l.b16 %v725
    %v1086 = vunpack.c.h.b16 %v725
    %v1087 = vunpack.c.l.b16 %v726
    %v1088 = vunpack.c.h.b16 %v726
    %v1089 = vunpack.c.l.b16 %v727
    %v1090 = vunpack.c.h.b16 %v727
    %v1091 = vunpack.c.l.b16 %v728
    %v1092 = vunpack.c.h.b16 %v728
    %v1093 = vunpack.c.l.b16 %v729
    %v1094 = vunpack.c.h.b16 %v729
    %v1095 = vunpack.c.l.b16 %v730
    %v1096 = vunpack.c.h.b16 %v730
    %v1097 = vunpack.c.l.b16 %v731
    %v1098 = vunpack.c.h.b16 %v731
    %v1099 = vunpack.c.l.b16 %v732
    %v1100 = vunpack.c.h.b16 %v732
    %v1101 = vunpack.c.l.b16 %v733
    %v1102 = vunpack.c.h.b16 %v733
    %v1103 = vunpack.c.l.b16 %v734
    %v1104 = vunpack.c.h.b16 %v734
    %v1105 = vunpack.c.l.b16 %v735
    %v1106 = vunpack.c.h.b16 %v735
    %v1107 = vunpack.c.l.b16 %v736
    %v1108 = vunpack.c.h.b16 %v736
    %v1109 = vunpack.c.l.b16 %v737
    %v1110 = vunpack.c.h.b16 %v737
    %v1111 = vunpack.c.l.b16 %v738
    %v1112 = vunpack.c.h.b16 %v738
    %v1113 = vunpack.c.l.b16 %v739
    %v1114 = vunpack.c.h.b16 %v739
    %v1115 = vunpack.c.l.b16 %v740
    %v1116 = vunpack.c.h.b16 %v740
    %v1117 = vunpack.c.l.b16 %v741
    %v1118 = vunpack.c.h.b16 %v741
    %v1119 = vunpack.c.l.b16 %v742
    %v1120 = vunpack.c.h.b16 %v742
    %v1121 = vunpack.c.l.b16 %v743
    %v1122 = vunpack.c.h.b16 %v743
    %v1123 = vunpack.c.l.b16 %v744
    %v1124 = vunpack.c.h.b16 %v744
    %v1125 = vunpack.c.l.b16 %v745
    %v1126 = vunpack.c.h.b16 %v745
    %v1127 = vunpack.c.l.b16 %v746
    %v1128 = vunpack.c.h.b16 %v746
    %v1129 = vunpack.c.l.b16 %v747
    %v1130 = vunpack.c.h.b16 %v747
    %v1131 = vunpack.c.l.b16 %v748
    %v1132 = vunpack.c.h.b16 %v748
    %v1133 = vunpack.c.l.b16 %v749
    %v1134 = vunpack.c.h.b16 %v749
    %v1135 = vunpack.c.l.b16 %v750
    %v1136 = vunpack.c.h.b16 %v750
    %v1137 = vunpack.c.l.b16 %v751
    %v1138 = vunpack.c.h.b16 %v751
    %v1139 = vunpack.c.l.b16 %v752
    %v1140 = vunpack.c.h.b16 %v752
    %v1141 = vunpack.c.l.b16 %v753
    %v1142 = vunpack.c.h.b16 %v753
    %v1143 = vunpack.c.l.b16 %v754
    %v1144 = vunpack.c.h.b16 %v754
    %v1145 = vunpack.c.l.b16 %v755
    %v1146 = vunpack.c.h.b16 %v755
    %v1147 = vunpack.c.l.b16 %v756
    %v1148 = vunpack.c.h.b16 %v756
    %v1149 = vunpack.c.l.b16 %v757
    %v1150 = vunpack.c.h.b16 %v757
    %v1151 = vunpack.c.l.b16 %v758
    %v1152 = vunpack.c.h.b16 %v758
    %v1153 = vunpack.c.l.b16 %v759
    %v1154 = vunpack.c.h.b16 %v759
    %v1155 = vunpack.c.l.b16 %v760
    %v1156 = vunpack.c.h.b16 %v760
    %v1157 = vunpack.c.l.b16 %v761
    %v1158 = vunpack.c.h.b16 %v761
    %v1159 = vunpack.c.l.b16 %v762
    %v1160 = vunpack.c.h.b16 %v762
    %v1161 = vunpack.c.l.b16 %v763
    %v1162 = vunpack.c.h.b16 %v763
    %v1163 = vunpack.c.l.b16 %v764
    %v1164 = vunpack.c.h.b16 %v764
    %v1165 = vunpack.c.l.b16 %v765
    %v1166 = vunpack.c.h.b16 %v765
    %v1167 = vunpack.c.l.b16 %v766
    %v1168 = vunpack.c.h.b16 %v766
    %v1169 = vunpack.c.l.b16 %v767
    %v1170 = vunpack.c.h.b16 %v767
    %v1171 = vunpack.c.l.b16 %v768
    %v1172 = vunpack.c.h.b16 %v768
    %v1173 = vunpack.c.l.b16 %v769
    %v1174 = vunpack.c.h.b16 %v769
    %v1175 = vunpack.c.l.b16 %v770
    %v1176 = vunpack.c.h.b16 %v770
    %v1177 = vpack.c.b16 %v925, %v921
    %v1178 = vpack.c.b16 %v926, %v922
    %v1179 = vpack.c.b16 %v927, %v923
    %v1180 = vpack.c.b16 %v928, %v924
    %v1181 = vpack.c.b16 %v933, %v929
    %v1182 = vpack.c.b16 %v934, %v930
    %v1183 = vpack.c.b16 %v935, %v931
    %v1184 = vpack.c.b16 %v936, %v932
    %v1185 = vpack.c.b16 %v941, %v937
    %v1186 = vpack.c.b16 %v942, %v938
    %v1187 = vpack.c.b16 %v943, %v939
    %v1188 = vpack.c.b16 %v944, %v940
    %v1189 = vpack.c.b16 %v949, %v945
    %v1190 = vpack.c.b16 %v950, %v946
    %v1191 = vpack.c.b16 %v951, %v947
    %v1192 = vpack.c.b16 %v952, %v948
    %v1193 = vpack.c.b16 %v957, %v953
    %v1194 = vpack.c.b16 %v958, %v954
    %v1195 = vpack.c.b16 %v959, %v955
    %v1196 = vpack.c.b16 %v960, %v956
    %v1197 = vpack.c.b16 %v965, %v961
    %v1198 = vpack.c.b16 %v966, %v962
    %v1199 = vpack.c.b16 %v967, %v963
    %v1200 = vpack.c.b16 %v968, %v964
    %v1201 = vpack.c.b16 %v973, %v969
    %v1202 = vpack.c.b16 %v974, %v970
    %v1203 = vpack.c.b16 %v975, %v971
    %v1204 = vpack.c.b16 %v976, %v972
    %v1205 = vpack.c.b16 %v981, %v977
    %v1206 = vpack.c.b16 %v982, %v978
    %v1207 = vpack.c.b16 %v983, %v979
    %v1208 = vpack.c.b16 %v984, %v980
    %v1209 = vpack.c.b16 %v989, %v985
    %v1210 = vpack.c.b16 %v990, %v986
    %v1211 = vpack.c.b16 %v991, %v987
    %v1212 = vpack.c.b16 %v992, %v988
    %v1213 = vpack.c.b16 %v997, %v993
    %v1214 = vpack.c.b16 %v998, %v994
    %v1215 = vpack.c.b16 %v999, %v995
    %v1216 = vpack.c.b16 %v1000, %v996
    %v1217 = vpack.c.b16 %v1005, %v1001
    %v1218 = vpack.c.b16 %v1006, %v1002
    %v1219 = vpack.c.b16 %v1007, %v1003
    %v1220 = vpack.c.b16 %v1008, %v1004
    %v1221 = vpack.c.b16 %v1013, %v1009
    %v1222 = vpack.c.b16 %v1014, %v1010
    %v1223 = vpack.c.b16 %v1015, %v1011
    %v1224 = vpack.c.b16 %v1016, %v1012
    %v1225 = vpack.c.b16 %v1021, %v1017
    %v1226 = vpack.c.b16 %v1022, %v1018
    %v1227 = vpack.c.b16 %v1023, %v1019
    %v1228 = vpack.c.b16 %v1024, %v1020
    %v1229 = vpack.c.b16 %v1029, %v1025
    %v1230 = vpack.c.b16 %v1030, %v1026
    %v1231 = vpack.c.b16 %v1031, %v1027
    %v1232 = vpack.c.b16 %v1032, %v1028
    %v1233 = vpack.c.b16 %v1037, %v1033
    %v1234 = vpack.c.b16 %v1038, %v1034
    %v1235 = vpack.c.b16 %v1039, %v1035
    %v1236 = vpack.c.b16 %v1040, %v1036
    %v1237 = vpack.c.b16 %v1045, %v1041
    %v1238 = vpack.c.b16 %v1046, %v1042
    %v1239 = vpack.c.b16 %v1047, %v1043
    %v1240 = vpack.c.b16 %v1048, %v1044
    %v1241 = vpack.c.b16 %v1053, %v1049
    %v1242 = vpack.c.b16 %v1054, %v1050
    %v1243 = vpack.c.b16 %v1055, %v1051
    %v1244 = vpack.c.b16 %v1056, %v1052
    %v1245 = vpack.c.b16 %v1061, %v1057
    %v1246 = vpack.c.b16 %v1062, %v1058
    %v1247 = vpack.c.b16 %v1063, %v1059
    %v1248 = vpack.c.b16 %v1064, %v1060
    %v1249 = vpack.c.b16 %v1069, %v1065
    %v1250 = vpack.c.b16 %v1070, %v1066
    %v1251 = vpack.c.b16 %v1071, %v1067
    %v1252 = vpack.c.b16 %v1072, %v1068
    %v1253 = vpack.c.b16 %v1077, %v1073
    %v1254 = vpack.c.b16 %v1078, %v1074
    %v1255 = vpack.c.b16 %v1079, %v1075
    %v1256 = vpack.c.b16 %v1080, %v1076
    %v1257 = vpack.c.b16 %v1085, %v1081
    %v1258 = vpack.c.b16 %v1086, %v1082
    %v1259 = vpack.c.b16 %v1087, %v1083
    %v1260 = vpack.c.b16 %v1088, %v1084
    %v1261 = vpack.c.b16 %v1093, %v1089
    %v1262 = vpack.c.b16 %v1094, %v1090
    %v1263 = vpack.c.b16 %v1095, %v1091
    %v1264 = vpack.c.b16 %v1096, %v1092
    %v1265 = vpack.c.b16 %v1101, %v1097
    %v1266 = vpack.c.b16 %v1102, %v1098
    %v1267 = vpack.c.b16 %v1103, %v1099
    %v1268 = vpack.c.b16 %v1104, %v1100
    %v1269 = vpack.c.b16 %v1109, %v1105
    %v1270 = vpack.c.b16 %v1110, %v1106
    %v1271 = vpack.c.b16 %v1111, %v1107
    %v1272 = vpack.c.b16 %v1112, %v1108
    %v1273 = vpack.c.b16 %v1117, %v1113
    %v1274 = vpack.c.b16 %v1118, %v1114
    %v1275 = vpack.c.b16 %v1119, %v1115
    %v1276 = vpack.c.b16 %v1120, %v1116
    %v1277 = vpack.c.b16 %v1125, %v1121
    %v1278 = vpack.c.b16 %v1126, %v1122
    %v1279 = vpack.c.b16 %v1127, %v1123
    %v1280 = vpack.c.b16 %v1128, %v1124
    %v1281 = vpack.c.b16 %v1133, %v1129
    %v1282 = vpack.c.b16 %v1134, %v1130
    %v1283 = vpack.c.b16 %v1135, %v1131
    %v1284 = vpack.c.b16 %v1136, %v1132
    %v1285 = vpack.c.b16 %v1141, %v1137
    %v1286 = vpack.c.b16 %v1142, %v1138
    %v1287 = vpack.c.b16 %v1143, %v1139
    %v1288 = vpack.c.b16 %v1144, %v1140
    %v1289 = vpack.c.b16 %v1149, %v1145
    %v1290 = vpack.c.b16 %v1150, %v1146
    %v1291 = vpack.c.b16 %v1151, %v1147
    %v1292 = vpack.c.b16 %v1152, %v1148
    %v1293 = vpack.c.b16 %v1157, %v1153
    %v1294 = vpack.c.b16 %v1158, %v1154
    %v1295 = vpack.c.b16 %v1159, %v1155
    %v1296 = vpack.c.b16 %v1160, %v1156
    %v1297 = vpack.c.b16 %v1165, %v1161
    %v1298 = vpack.c.b16 %v1166, %v1162
    %v1299 = vpack.c.b16 %v1167, %v1163
    %v1300 = vpack.c.b16 %v1168, %v1164
    %v1301 = vpack.c.b16 %v1173, %v1169
    %v1302 = vpack.c.b16 %v1174, %v1170
    %v1303 = vpack.c.b16 %v1175, %v1171
    %v1304 = vpack.c.b16 %v1176, %v1172
    %1433 = vmatprep.subr.bf16.mxu0 %v1178
    %1434 = vmatpush1.bf16.msra.mxu0 %v1177
    %1435 = vmatprep.subr.bf16.mxu0 %v1182
    %1436 = vmatpush1.bf16.msra.mxu0 %v1181
    %1437 = vmatprep.subr.bf16.mxu0 %v1186
    %1438 = vmatpush1.bf16.msra.mxu0 %v1185
    %1439 = vmatprep.subr.bf16.mxu0 %v1190
    %1440 = vmatpush1.bf16.msra.mxu0 %v1189
    %1441 = vmatprep.subr.bf16.mxu0 %v1194
    %1442 = vmatpush1.bf16.msra.mxu0 %v1193
    %1443 = vmatprep.subr.bf16.mxu0 %v1198
    %1444 = vmatpush1.bf16.msra.mxu0 %v1197
    %1445 = vmatprep.subr.bf16.mxu0 %v1202
    %1446 = vmatpush1.bf16.msra.mxu0 %v1201
    %1447 = vmatprep.subr.bf16.mxu0 %v1206
    %1448 = vmatpush1.bf16.msra.mxu0 %v1205
    %1449 = vmatprep.subr.bf16.mxu0 %v1210
    %1450 = vmatpush1.bf16.msra.mxu0 %v1209
    %1451 = vmatprep.subr.bf16.mxu0 %v1214
    %1452 = vmatpush1.bf16.msra.mxu0 %v1213
    %1453 = vmatprep.subr.bf16.mxu0 %v1218
    %1454 = vmatpush1.bf16.msra.mxu0 %v1217
    %1455 = vmatprep.subr.bf16.mxu0 %v1222
    %1456 = vmatpush1.bf16.msra.mxu0 %v1221
    %1457 = vmatprep.subr.bf16.mxu0 %v1226
    %1458 = vmatpush1.bf16.msra.mxu0 %v1225
    %1459 = vmatprep.subr.bf16.mxu0 %v1230
    %1460 = vmatpush1.bf16.msra.mxu0 %v1229
    %1461 = vmatprep.subr.bf16.mxu0 %v1234
    %1462 = vmatpush1.bf16.msra.mxu0 %v1233
    %1463 = vmatprep.subr.bf16.mxu0 %v1238
    %1464 = vmatpush1.bf16.msra.mxu0 %v1237
    %1465 = vmatprep.mubr.bf16.mxu0 %v640
    %1466 = vmatmul.mubr.bf16.gmra.mrb[0].mxu0 %v639
    %v1467 = vpop.f32.mrb[0].mxu0
    %v1468 = vadd.f32 %v776, %v1467
    %v1469 = vpop.f32.mrb[0].mxu0
    %v1470 = vadd.f32 %v780, %v1469
    %v1471 = vpop.f32.mrb[0].mxu0
    %v1472 = vpop.f32.mrb[0].mxu0
    %1473 = vdwg.mxu0
    %1474 = vmatprep.subr.bf16.mxu0 %v1242
    %1475 = vmatpush1.bf16.msra.mxu0 %v1241
    %1476 = vmatprep.subr.bf16.mxu0 %v1246
    %1477 = vmatpush1.bf16.msra.mxu0 %v1245
    %1478 = vmatprep.subr.bf16.mxu0 %v1250
    %1479 = vmatpush1.bf16.msra.mxu0 %v1249
    %1480 = vmatprep.subr.bf16.mxu0 %v1254
    %1481 = vmatpush1.bf16.msra.mxu0 %v1253
    %1482 = vmatprep.subr.bf16.mxu0 %v1258
    %1483 = vmatpush1.bf16.msra.mxu0 %v1257
    %1484 = vmatprep.subr.bf16.mxu0 %v1262
    %1485 = vmatpush1.bf16.msra.mxu0 %v1261
    %1486 = vmatprep.subr.bf16.mxu0 %v1266
    %1487 = vmatpush1.bf16.msra.mxu0 %v1265
    %1488 = vmatprep.subr.bf16.mxu0 %v1270
    %1489 = vmatpush1.bf16.msra.mxu0 %v1269
    %1490 = vmatprep.subr.bf16.mxu0 %v1274
    %1491 = vmatpush1.bf16.msra.mxu0 %v1273
    %1492 = vmatprep.subr.bf16.mxu0 %v1278
    %1493 = vmatpush1.bf16.msra.mxu0 %v1277
    %1494 = vmatprep.subr.bf16.mxu0 %v1282
    %1495 = vmatpush1.bf16.msra.mxu0 %v1281
    %1496 = vmatprep.subr.bf16.mxu0 %v1286
    %1497 = vmatpush1.bf16.msra.mxu0 %v1285
    %1498 = vmatprep.subr.bf16.mxu0 %v1290
    %1499 = vmatpush1.bf16.msra.mxu0 %v1289
    %1500 = vmatprep.subr.bf16.mxu0 %v1294
    %1501 = vmatpush1.bf16.msra.mxu0 %v1293
    %1502 = vmatprep.subr.bf16.mxu0 %v1298
    %1503 = vmatpush1.bf16.msra.mxu0 %v1297
    %1504 = vmatprep.subr.bf16.mxu0 %v1302
    %1505 = vmatpush1.bf16.msra.mxu0 %v1301
    %1506 = vmatprep.mubr.bf16.mxu0 %v642
    %1507 = vmatmul.mubr.bf16.gmra.mrb[0].mxu0 %v641
    %v1508 = vpop.f32.mrb[0].mxu0
    %v1509 = vadd.f32 %v1468, %v1508
    %v1510 = vpop.f32.mrb[0].mxu0
    %v1511 = vadd.f32 %v1470, %v1510
    %v1512 = vpop.f32.mrb[0].mxu0
    %v1513 = vpop.f32.mrb[0].mxu0
    %1514 = vdwg.mxu0
    %1515 = vmatprep.subr.bf16.mxu0 %v1180
    %1516 = vmatpush1.bf16.msra.mxu0 %v1179
    %1517 = vmatprep.subr.bf16.mxu0 %v1184
    %1518 = vmatpush1.bf16.msra.mxu0 %v1183
    %1519 = vmatprep.subr.bf16.mxu0 %v1188
    %1520 = vmatpush1.bf16.msra.mxu0 %v1187
    %1521 = vmatprep.subr.bf16.mxu0 %v1192
    %1522 = vmatpush1.bf16.msra.mxu0 %v1191
    %1523 = vmatprep.subr.bf16.mxu0 %v1196
    %1524 = vmatpush1.bf16.msra.mxu0 %v1195
    %1525 = vmatprep.subr.bf16.mxu0 %v1200
    %1526 = vmatpush1.bf16.msra.mxu0 %v1199
    %1527 = vmatprep.subr.bf16.mxu0 %v1204
    %1528 = vmatpush1.bf16.msra.mxu0 %v1203
    %1529 = vmatprep.subr.bf16.mxu0 %v1208
    %1530 = vmatpush1.bf16.msra.mxu0 %v1207
    %1531 = vmatprep.subr.bf16.mxu0 %v1212
    %1532 = vmatpush1.bf16.msra.mxu0 %v1211
    %1533 = vmatprep.subr.bf16.mxu0 %v1216
    %1534 = vmatpush1.bf16.msra.mxu0 %v1215
    %1535 = vmatprep.subr.bf16.mxu0 %v1220
    %1536 = vmatpush1.bf16.msra.mxu0 %v1219
    %1537 = vmatprep.subr.bf16.mxu0 %v1224
    %1538 = vmatpush1.bf16.msra.mxu0 %v1223
    %1539 = vmatprep.subr.bf16.mxu0 %v1228
    %1540 = vmatpush1.bf16.msra.mxu0 %v1227
    %1541 = vmatprep.subr.bf16.mxu0 %v1232
    %1542 = vmatpush1.bf16.msra.mxu0 %v1231
    %1543 = vmatprep.subr.bf16.mxu0 %v1236
    %1544 = vmatpush1.bf16.msra.mxu0 %v1235
    %1545 = vmatprep.subr.bf16.mxu0 %v1240
    %1546 = vmatpush1.bf16.msra.mxu0 %v1239
    %1547 = vmatprep.mubr.bf16.mxu0 %v640
    %1548 = vmatmul.mubr.bf16.gmra.mrb[0].mxu0 %v639
    %v1549 = vpop.f32.mrb[0].mxu0
    %v1550 = vadd.f32 %v784, %v1549
    %v1551 = vpop.f32.mrb[0].mxu0
    %v1552 = vadd.f32 %v788, %v1551
    %v1553 = vpop.f32.mrb[0].mxu0
    %v1554 = vpop.f32.mrb[0].mxu0
    %1555 = vdwg.mxu0
    %1556 = vmatprep.subr.bf16.mxu0 %v1244
    %1557 = vmatpush1.bf16.msra.mxu0 %v1243
    %1558 = vmatprep.subr.bf16.mxu0 %v1248
    %1559 = vmatpush1.bf16.msra.mxu0 %v1247
    %1560 = vmatprep.subr.bf16.mxu0 %v1252
    %1561 = vmatpush1.bf16.msra.mxu0 %v1251
    %1562 = vmatprep.subr.bf16.mxu0 %v1256
    %1563 = vmatpush1.bf16.msra.mxu0 %v1255
    %1564 = vmatprep.subr.bf16.mxu0 %v1260
    %1565 = vmatpush1.bf16.msra.mxu0 %v1259
    %1566 = vmatprep.subr.bf16.mxu0 %v1264
    %1567 = vmatpush1.bf16.msra.mxu0 %v1263
    %1568 = vmatprep.subr.bf16.mxu0 %v1268
    %1569 = vmatpush1.bf16.msra.mxu0 %v1267
    %1570 = vmatprep.subr.bf16.mxu0 %v1272
    %1571 = vmatpush1.bf16.msra.mxu0 %v1271
    %1572 = vmatprep.subr.bf16.mxu0 %v1276
    %1573 = vmatpush1.bf16.msra.mxu0 %v1275
    %1574 = vmatprep.subr.bf16.mxu0 %v1280
    %1575 = vmatpush1.bf16.msra.mxu0 %v1279
    %1576 = vmatprep.subr.bf16.mxu0 %v1284
    %1577 = vmatpush1.bf16.msra.mxu0 %v1283
    %1578 = vmatprep.subr.bf16.mxu0 %v1288
    %1579 = vmatpush1.bf16.msra.mxu0 %v1287
    %1580 = vmatprep.subr.bf16.mxu0 %v1292
    %1581 = vmatpush1.bf16.msra.mxu0 %v1291
    %1582 = vmatprep.subr.bf16.mxu0 %v1296
    %1583 = vmatpush1.bf16.msra.mxu0 %v1295
    %1584 = vmatprep.subr.bf16.mxu0 %v1300
    %1585 = vmatpush1.bf16.msra.mxu0 %v1299
    %1586 = vmatprep.subr.bf16.mxu0 %v1304
    %1587 = vmatpush1.bf16.msra.mxu0 %v1303
    %1588 = vmatprep.mubr.bf16.mxu0 %v642
    %1589 = vmatmul.mubr.bf16.gmra.mrb[0].mxu0 %v641
    %v1590 = vpop.f32.mrb[0].mxu0
    %v1591 = vadd.f32 %v1550, %v1590
    %v1592 = vpop.f32.mrb[0].mxu0
    %v1593 = vadd.f32 %v1552, %v1592
    %v1594 = vpop.f32.mrb[0].mxu0
    %v1595 = vpop.f32.mrb[0].mxu0
    %1596 = vdwg.mxu0
    %v1597 = vmax.f32 %v1509, 0.0
    %v1598 = vmax.f32 %v1511, 0.0
    %v1599 = vmax.f32 %v1591, 0.0
    %v1600 = vmax.f32 %v1593, 0.0
    %v1601 = vrot.slane %v1597, 4
    %v1602 = vadd.f32 %v1597, %v1601
    %v1603 = vrot.slane %v1602, 2
    %v1604 = vadd.f32 %v1602, %v1603
    %v1605 = vrot.slane %v1604, 1
    %v1606 = vadd.f32 %v1604, %v1605
    %v1607 = vrot.slane %v1598, 4
    %v1608 = vadd.f32 %v1598, %v1607
    %v1609 = vrot.slane %v1608, 2
    %v1610 = vadd.f32 %v1608, %v1609
    %v1611 = vrot.slane %v1610, 1
    %v1612 = vadd.f32 %v1610, %v1611
    %v1613 = vrot.slane %v1599, 4
    %v1614 = vadd.f32 %v1599, %v1613
    %v1615 = vrot.slane %v1614, 2
    %v1616 = vadd.f32 %v1614, %v1615
    %v1617 = vrot.slane %v1616, 1
    %v1618 = vadd.f32 %v1616, %v1617
    %v1619 = vrot.slane %v1600, 4
    %v1620 = vadd.f32 %v1600, %v1619
    %v1621 = vrot.slane %v1620, 2
    %v1622 = vadd.f32 %v1620, %v1621
    %v1623 = vrot.slane %v1622, 1
    %v1624 = vadd.f32 %v1622, %v1623
    %v1625 = vmul.f32 %v1606, %v470
    %v1626 = vmul.f32 %v1612, %v470
    %v1627 = vmul.f32 %v1618, %v470
    %v1628 = vmul.f32 %v1624, %v470
    %v1629 = vmul.f32 %v1597, %v1597
    %v1630 = vmul.f32 %v1598, %v1598
    %v1631 = vmul.f32 %v1599, %v1599
    %v1632 = vmul.f32 %v1600, %v1600
    %v1633 = vrot.slane %v1629, 4
    %v1634 = vadd.f32 %v1629, %v1633
    %v1635 = vrot.slane %v1634, 2
    %v1636 = vadd.f32 %v1634, %v1635
    %v1637 = vrot.slane %v1636, 1
    %v1638 = vadd.f32 %v1636, %v1637
    %v1639 = vrot.slane %v1630, 4
    %v1640 = vadd.f32 %v1630, %v1639
    %v1641 = vrot.slane %v1640, 2
    %v1642 = vadd.f32 %v1640, %v1641
    %v1643 = vrot.slane %v1642, 1
    %v1644 = vadd.f32 %v1642, %v1643
    %v1645 = vrot.slane %v1631, 4
    %v1646 = vadd.f32 %v1631, %v1645
    %v1647 = vrot.slane %v1646, 2
    %v1648 = vadd.f32 %v1646, %v1647
    %v1649 = vrot.slane %v1648, 1
    %v1650 = vadd.f32 %v1648, %v1649
    %v1651 = vrot.slane %v1632, 4
    %v1652 = vadd.f32 %v1632, %v1651
    %v1653 = vrot.slane %v1652, 2
    %v1654 = vadd.f32 %v1652, %v1653
    %v1655 = vrot.slane %v1654, 1
    %v1656 = vadd.f32 %v1654, %v1655
    %v1657 = vmul.f32 %v1638, %v470
    %v1658 = vmul.f32 %v1644, %v470
    %v1659 = vmul.f32 %v1650, %v470
    %v1660 = vmul.f32 %v1656, %v470
    %v1661 = vmul.f32 %v1625, %v1625
    %v1662 = vmul.f32 %v1626, %v1626
    %v1663 = vmul.f32 %v1627, %v1627
    %v1664 = vmul.f32 %v1628, %v1628
    %v1665 = vsub.f32 %v1657, %v1661
    %v1666 = vsub.f32 %v1658, %v1662
    %v1667 = vsub.f32 %v1659, %v1663
    %v1668 = vsub.f32 %v1660, %v1664
    %v1669 = vld [vmem:[%s7] sm:$0xf]
    %v1670 = vadd.f32 %v1665, 1e-05
    %v1671 = vadd.f32 %v1666, 1e-05
    %v1672 = vadd.f32 %v1667, 1e-05
    %v1673 = vadd.f32 %v1668, 1e-05
    %v1674 = vrsqrt.pop %v1670
    %v1675 = vrsqrt.pop %v1671
    %v1676 = vrsqrt.pop %v1672
    %v1677 = vrsqrt.pop %v1673
    %v1682 = vcombine.low %v1674, %v1675
    %v1683 = vcombine.low %v1676, %v1677
    %v1685 = vunpack.c.l.s4 1966171168
    %v1686 = vunpack.c.0.s8 %v1685
    %v1687 = vlaneseq
    %v1688 = vshrl.u32 %v1687, 7
    %v1689 = vsub.s32 %v1686, %v1688
    %v1690 = vrot.slane %v1682, %v1689
    %v1692 = vunpack.c.l.s4 1966171168
    %v1693 = vunpack.c.0.s8 %v1692
    %v1694 = vlaneseq
    %v1695 = vshrl.u32 %v1694, 7
    %v1696 = vsub.s32 %v1693, %v1695
    %v1697 = vrot.slane %v1683, %v1696
    %v1698 = vcombine.low %v1690, %v1697
    %v1700 = vunpack.c.l.s4 1966171168
    %v1701 = vunpack.c.0.s8 %v1700
    %v1702 = vlaneseq
    %v1703 = vshrl.u32 %v1702, 7
    %v1704 = vsub.s32 %v1701, %v1703
    %v1705 = vrot.slane %v1698, %v1704
    %v1707 = vmul.f32 %v1669, %v1705
    %v1708 = vld [vmem:[%s8] sm:$0xf]
    %v1710 = vlaneseq
    %v1711 = vshrl.u32 %v1710, 7
    %v1712 = vsub.s32 0, %v1711
    %v1713 = vrot.slane %v1707, %v1712
    %v1714 = vlaneseq
    %v1715 = vshrl.u32 %v1714, 7
    %v1716 = vsub.s32 1, %v1715
    %v1717 = vrot.slane %v1707, %v1716
    %v1718 = vlaneseq
    %v1719 = vshrl.u32 %v1718, 7
    %v1720 = vsub.s32 2, %v1719
    %v1721 = vrot.slane %v1707, %v1720
    %v1722 = vlaneseq
    %v1723 = vshrl.u32 %v1722, 7
    %v1724 = vsub.s32 3, %v1723
    %v1725 = vrot.slane %v1707, %v1724
    %v1730 = vmul.f32 %v1625, %v1713
    %v1731 = vmul.f32 %v1626, %v1717
    %v1732 = vmul.f32 %v1627, %v1721
    %v1733 = vmul.f32 %v1628, %v1725
    %v1738 = vcombine.low %v1730, %v1731
    %v1739 = vcombine.low %v1732, %v1733
    %v1741 = vunpack.c.l.s4 1966171168
    %v1742 = vunpack.c.0.s8 %v1741
    %v1743 = vlaneseq
    %v1744 = vshrl.u32 %v1743, 7
    %v1745 = vsub.s32 %v1742, %v1744
    %v1746 = vrot.slane %v1738, %v1745
    %v1748 = vunpack.c.l.s4 1966171168
    %v1749 = vunpack.c.0.s8 %v1748
    %v1750 = vlaneseq
    %v1751 = vshrl.u32 %v1750, 7
    %v1752 = vsub.s32 %v1749, %v1751
    %v1753 = vrot.slane %v1739, %v1752
    %v1754 = vcombine.low %v1746, %v1753
    %v1756 = vunpack.c.l.s4 1966171168
    %v1757 = vunpack.c.0.s8 %v1756
    %v1758 = vlaneseq
    %v1759 = vshrl.u32 %v1758, 7
    %v1760 = vsub.s32 %v1757, %v1759
    %v1761 = vrot.slane %v1754, %v1760
    %v1763 = vsub.f32 %v1708, %v1761
    %v1764 = vmul.f32 %v1597, %v1713
    %v1765 = vmul.f32 %v1598, %v1717
    %v1766 = vmul.f32 %v1599, %v1721
    %v1767 = vmul.f32 %v1600, %v1725
    %v1769 = vlaneseq
    %v1770 = vshrl.u32 %v1769, 7
    %v1771 = vsub.s32 0, %v1770
    %v1772 = vrot.slane %v1763, %v1771
    %v1773 = vlaneseq
    %v1774 = vshrl.u32 %v1773, 7
    %v1775 = vsub.s32 1, %v1774
    %v1776 = vrot.slane %v1763, %v1775
    %v1777 = vlaneseq
    %v1778 = vshrl.u32 %v1777, 7
    %v1779 = vsub.s32 2, %v1778
    %v1780 = vrot.slane %v1763, %v1779
    %v1781 = vlaneseq
    %v1782 = vshrl.u32 %v1781, 7
    %v1783 = vsub.s32 3, %v1782
    %v1784 = vrot.slane %v1763, %v1783
    %v1789 = vadd.f32 %v1764, %v1772
    %v1790 = vadd.f32 %v1765, %v1776
    %v1791 = vadd.f32 %v1766, %v1780
    %v1792 = vadd.f32 %v1767, %v1784
    %v1793 = vpack.c.bf16 %v1789, %v1789
    %v1794 = vpack.c.bf16 %v1790, %v1790
    %v1795 = vpack.c.bf16 %v1791, %v1791
    %v1796 = vpack.c.bf16 %v1792, %v1792
    %v1797 = vld [vmem:[#allocation8] sm:$0xff]
    %v1798 = vld [vmem:[#allocation8 + $0x8] sm:$0xff]
    %v1799 = vld [vmem:[#allocation8 + $0x10] sm:$0xff]
    %v1800 = vld [vmem:[#allocation8 + $0x18] sm:$0xff]
    %v1801 = vld [vmem:[#allocation8 + $0x20] sm:$0xff]
    %v1802 = vld [vmem:[#allocation8 + $0x28] sm:$0xff]
    %v1803 = vld [vmem:[#allocation8 + $0x30] sm:$0xff]
    %v1804 = vld [vmem:[#allocation8 + $0x38] sm:$0xff]
    %v1805 = vld [vmem:[#allocation8 + $0x40] sm:$0xff]
    %v1806 = vld [vmem:[#allocation8 + $0x48] sm:$0xff]
    %v1807 = vld [vmem:[#allocation8 + $0x50] sm:$0xff]
    %v1808 = vld [vmem:[#allocation8 + $0x58] sm:$0xff]
    %v1809 = vld [vmem:[#allocation8 + $0x60] sm:$0xff]
    %v1810 = vld [vmem:[#allocation8 + $0x68] sm:$0xff]
    %v1811 = vld [vmem:[#allocation8 + $0x70] sm:$0xff]
    %v1812 = vld [vmem:[#allocation8 + $0x78] sm:$0xff]
    %v1813 = vld [vmem:[#allocation8 + $0x80] sm:$0xff]
    %v1814 = vld [vmem:[#allocation8 + $0x88] sm:$0xff]
    %v1815 = vld [vmem:[#allocation8 + $0x90] sm:$0xff]
    %v1816 = vld [vmem:[#allocation8 + $0x98] sm:$0xff]
    %v1817 = vld [vmem:[#allocation8 + $0xa0] sm:$0xff]
    %v1818 = vld [vmem:[#allocation8 + $0xa8] sm:$0xff]
    %v1819 = vld [vmem:[#allocation8 + $0xb0] sm:$0xff]
    %v1820 = vld [vmem:[#allocation8 + $0xb8] sm:$0xff]
    %v1821 = vld [vmem:[#allocation8 + $0xc0] sm:$0xff]
    %v1822 = vld [vmem:[#allocation8 + $0xc8] sm:$0xff]
    %v1823 = vld [vmem:[#allocation8 + $0xd0] sm:$0xff]
    %v1824 = vld [vmem:[#allocation8 + $0xd8] sm:$0xff]
    %v1825 = vld [vmem:[#allocation8 + $0xe0] sm:$0xff]
    %v1826 = vld [vmem:[#allocation8 + $0xe8] sm:$0xff]
    %v1827 = vld [vmem:[#allocation8 + $0xf0] sm:$0xff]
    %v1828 = vld [vmem:[#allocation8 + $0xf8] sm:$0xff]
    %v1829 = vld [vmem:[#allocation8 + $0x100] sm:$0xff]
    %v1830 = vld [vmem:[#allocation8 + $0x108] sm:$0xff]
    %v1831 = vld [vmem:[#allocation8 + $0x110] sm:$0xff]
    %v1832 = vld [vmem:[#allocation8 + $0x118] sm:$0xff]
    %v1833 = vld [vmem:[#allocation8 + $0x120] sm:$0xff]
    %v1834 = vld [vmem:[#allocation8 + $0x128] sm:$0xff]
    %v1835 = vld [vmem:[#allocation8 + $0x130] sm:$0xff]
    %v1836 = vld [vmem:[#allocation8 + $0x138] sm:$0xff]
    %v1837 = vld [vmem:[#allocation8 + $0x140] sm:$0xff]
    %v1838 = vld [vmem:[#allocation8 + $0x148] sm:$0xff]
    %v1839 = vld [vmem:[#allocation8 + $0x150] sm:$0xff]
    %v1840 = vld [vmem:[#allocation8 + $0x158] sm:$0xff]
    %v1841 = vld [vmem:[#allocation8 + $0x160] sm:$0xff]
    %v1842 = vld [vmem:[#allocation8 + $0x168] sm:$0xff]
    %v1843 = vld [vmem:[#allocation8 + $0x170] sm:$0xff]
    %v1844 = vld [vmem:[#allocation8 + $0x178] sm:$0xff]
    %v1845 = vld [vmem:[#allocation8 + $0x180] sm:$0xff]
    %v1846 = vld [vmem:[#allocation8 + $0x188] sm:$0xff]
    %v1847 = vld [vmem:[#allocation8 + $0x190] sm:$0xff]
    %v1848 = vld [vmem:[#allocation8 + $0x198] sm:$0xff]
    %v1849 = vld [vmem:[#allocation8 + $0x1a0] sm:$0xff]
    %v1850 = vld [vmem:[#allocation8 + $0x1a8] sm:$0xff]
    %v1851 = vld [vmem:[#allocation8 + $0x1b0] sm:$0xff]
    %v1852 = vld [vmem:[#allocation8 + $0x1b8] sm:$0xff]
    %v1853 = vld [vmem:[#allocation8 + $0x1c0] sm:$0xff]
    %v1854 = vld [vmem:[#allocation8 + $0x1c8] sm:$0xff]
    %v1855 = vld [vmem:[#allocation8 + $0x1d0] sm:$0xff]
    %v1856 = vld [vmem:[#allocation8 + $0x1d8] sm:$0xff]
    %v1857 = vld [vmem:[#allocation8 + $0x1e0] sm:$0xff]
    %v1858 = vld [vmem:[#allocation8 + $0x1e8] sm:$0xff]
    %v1859 = vld [vmem:[#allocation8 + $0x1f0] sm:$0xff]
    %v1860 = vld [vmem:[#allocation8 + $0x1f8] sm:$0xff]
    %v1861 = vld [vmem:[%s10] sm:$0x3]
    %v1863 = vlaneseq
    %v1864 = vshrl.u32 %v1863, 7
    %v1865 = vsub.s32 0, %v1864
    %v1866 = vrot.slane %v1861, %v1865
    %v1867 = vlaneseq
    %v1868 = vshrl.u32 %v1867, 7
    %v1869 = vsub.s32 1, %v1868
    %v1870 = vrot.slane %v1861, %v1869
    %v1937 = vunpack.c.l.b16 %v1797
    %v1938 = vunpack.c.h.b16 %v1797
    %v1939 = vunpack.c.l.b16 %v1798
    %v1940 = vunpack.c.h.b16 %v1798
    %v1941 = vunpack.c.l.b16 %v1799
    %v1942 = vunpack.c.h.b16 %v1799
    %v1943 = vunpack.c.l.b16 %v1800
    %v1944 = vunpack.c.h.b16 %v1800
    %v1945 = vunpack.c.l.b16 %v1801
    %v1946 = vunpack.c.h.b16 %v1801
    %v1947 = vunpack.c.l.b16 %v1802
    %v1948 = vunpack.c.h.b16 %v1802
    %v1949 = vunpack.c.l.b16 %v1803
    %v1950 = vunpack.c.h.b16 %v1803
    %v1951 = vunpack.c.l.b16 %v1804
    %v1952 = vunpack.c.h.b16 %v1804
    %v1953 = vunpack.c.l.b16 %v1805
    %v1954 = vunpack.c.h.b16 %v1805
    %v1955 = vunpack.c.l.b16 %v1806
    %v1956 = vunpack.c.h.b16 %v1806
    %v1957 = vunpack.c.l.b16 %v1807
    %v1958 = vunpack.c.h.b16 %v1807
    %v1959 = vunpack.c.l.b16 %v1808
    %v1960 = vunpack.c.h.b16 %v1808
    %v1961 = vunpack.c.l.b16 %v1809
    %v1962 = vunpack.c.h.b16 %v1809
    %v1963 = vunpack.c.l.b16 %v1810
    %v1964 = vunpack.c.h.b16 %v1810
    %v1965 = vunpack.c.l.b16 %v1811
    %v1966 = vunpack.c.h.b16 %v1811
    %v1967 = vunpack.c.l.b16 %v1812
    %v1968 = vunpack.c.h.b16 %v1812
    %v1969 = vunpack.c.l.b16 %v1813
    %v1970 = vunpack.c.h.b16 %v1813
    %v1971 = vunpack.c.l.b16 %v1814
    %v1972 = vunpack.c.h.b16 %v1814
    %v1973 = vunpack.c.l.b16 %v1815
    %v1974 = vunpack.c.h.b16 %v1815
    %v1975 = vunpack.c.l.b16 %v1816
    %v1976 = vunpack.c.h.b16 %v1816
    %v1977 = vunpack.c.l.b16 %v1817
    %v1978 = vunpack.c.h.b16 %v1817
    %v1979 = vunpack.c.l.b16 %v1818
    %v1980 = vunpack.c.h.b16 %v1818
    %v1981 = vunpack.c.l.b16 %v1819
    %v1982 = vunpack.c.h.b16 %v1819
    %v1983 = vunpack.c.l.b16 %v1820
    %v1984 = vunpack.c.h.b16 %v1820
    %v1985 = vunpack.c.l.b16 %v1821
    %v1986 = vunpack.c.h.b16 %v1821
    %v1987 = vunpack.c.l.b16 %v1822
    %v1988 = vunpack.c.h.b16 %v1822
    %v1989 = vunpack.c.l.b16 %v1823
    %v1990 = vunpack.c.h.b16 %v1823
    %v1991 = vunpack.c.l.b16 %v1824
    %v1992 = vunpack.c.h.b16 %v1824
    %v1993 = vunpack.c.l.b16 %v1825
    %v1994 = vunpack.c.h.b16 %v1825
    %v1995 = vunpack.c.l.b16 %v1826
    %v1996 = vunpack.c.h.b16 %v1826
    %v1997 = vunpack.c.l.b16 %v1827
    %v1998 = vunpack.c.h.b16 %v1827
    %v1999 = vunpack.c.l.b16 %v1828
    %v2000 = vunpack.c.h.b16 %v1828
    %v2001 = vunpack.c.l.b16 %v1829
    %v2002 = vunpack.c.h.b16 %v1829
    %v2003 = vunpack.c.l.b16 %v1830
    %v2004 = vunpack.c.h.b16 %v1830
    %v2005 = vunpack.c.l.b16 %v1831
    %v2006 = vunpack.c.h.b16 %v1831
    %v2007 = vunpack.c.l.b16 %v1832
    %v2008 = vunpack.c.h.b16 %v1832
    %v2009 = vunpack.c.l.b16 %v1833
    %v2010 = vunpack.c.h.b16 %v1833
    %v2011 = vunpack.c.l.b16 %v1834
    %v2012 = vunpack.c.h.b16 %v1834
    %v2013 = vunpack.c.l.b16 %v1835
    %v2014 = vunpack.c.h.b16 %v1835
    %v2015 = vunpack.c.l.b16 %v1836
    %v2016 = vunpack.c.h.b16 %v1836
    %v2017 = vunpack.c.l.b16 %v1837
    %v2018 = vunpack.c.h.b16 %v1837
    %v2019 = vunpack.c.l.b16 %v1838
    %v2020 = vunpack.c.h.b16 %v1838
    %v2021 = vunpack.c.l.b16 %v1839
    %v2022 = vunpack.c.h.b16 %v1839
    %v2023 = vunpack.c.l.b16 %v1840
    %v2024 = vunpack.c.h.b16 %v1840
    %v2025 = vunpack.c.l.b16 %v1841
    %v2026 = vunpack.c.h.b16 %v1841
    %v2027 = vunpack.c.l.b16 %v1842
    %v2028 = vunpack.c.h.b16 %v1842
    %v2029 = vunpack.c.l.b16 %v1843
    %v2030 = vunpack.c.h.b16 %v1843
    %v2031 = vunpack.c.l.b16 %v1844
    %v2032 = vunpack.c.h.b16 %v1844
    %v2033 = vunpack.c.l.b16 %v1845
    %v2034 = vunpack.c.h.b16 %v1845
    %v2035 = vunpack.c.l.b16 %v1846
    %v2036 = vunpack.c.h.b16 %v1846
    %v2037 = vunpack.c.l.b16 %v1847
    %v2038 = vunpack.c.h.b16 %v1847
    %v2039 = vunpack.c.l.b16 %v1848
    %v2040 = vunpack.c.h.b16 %v1848
    %v2041 = vunpack.c.l.b16 %v1849
    %v2042 = vunpack.c.h.b16 %v1849
    %v2043 = vunpack.c.l.b16 %v1850
    %v2044 = vunpack.c.h.b16 %v1850
    %v2045 = vunpack.c.l.b16 %v1851
    %v2046 = vunpack.c.h.b16 %v1851
    %v2047 = vunpack.c.l.b16 %v1852
    %v2048 = vunpack.c.h.b16 %v1852
    %v2049 = vunpack.c.l.b16 %v1853
    %v2050 = vunpack.c.h.b16 %v1853
    %v2051 = vunpack.c.l.b16 %v1854
    %v2052 = vunpack.c.h.b16 %v1854
    %v2053 = vunpack.c.l.b16 %v1855
    %v2054 = vunpack.c.h.b16 %v1855
    %v2055 = vunpack.c.l.b16 %v1856
    %v2056 = vunpack.c.h.b16 %v1856
    %v2057 = vunpack.c.l.b16 %v1857
    %v2058 = vunpack.c.h.b16 %v1857
    %v2059 = vunpack.c.l.b16 %v1858
    %v2060 = vunpack.c.h.b16 %v1858
    %v2061 = vunpack.c.l.b16 %v1859
    %v2062 = vunpack.c.h.b16 %v1859
    %v2063 = vunpack.c.l.b16 %v1860
    %v2064 = vunpack.c.h.b16 %v1860
    %v2065 = vpack.c.b16 %v1939, %v1937
    %v2066 = vpack.c.b16 %v1940, %v1938
    %v2067 = vpack.c.b16 %v1943, %v1941
    %v2068 = vpack.c.b16 %v1944, %v1942
    %v2069 = vpack.c.b16 %v1947, %v1945
    %v2070 = vpack.c.b16 %v1948, %v1946
    %v2071 = vpack.c.b16 %v1951, %v1949
    %v2072 = vpack.c.b16 %v1952, %v1950
    %v2073 = vpack.c.b16 %v1955, %v1953
    %v2074 = vpack.c.b16 %v1956, %v1954
    %v2075 = vpack.c.b16 %v1959, %v1957
    %v2076 = vpack.c.b16 %v1960, %v1958
    %v2077 = vpack.c.b16 %v1963, %v1961
    %v2078 = vpack.c.b16 %v1964, %v1962
    %v2079 = vpack.c.b16 %v1967, %v1965
    %v2080 = vpack.c.b16 %v1968, %v1966
    %v2081 = vpack.c.b16 %v1971, %v1969
    %v2082 = vpack.c.b16 %v1972, %v1970
    %v2083 = vpack.c.b16 %v1975, %v1973
    %v2084 = vpack.c.b16 %v1976, %v1974
    %v2085 = vpack.c.b16 %v1979, %v1977
    %v2086 = vpack.c.b16 %v1980, %v1978
    %v2087 = vpack.c.b16 %v1983, %v1981
    %v2088 = vpack.c.b16 %v1984, %v1982
    %v2089 = vpack.c.b16 %v1987, %v1985
    %v2090 = vpack.c.b16 %v1988, %v1986
    %v2091 = vpack.c.b16 %v1991, %v1989
    %v2092 = vpack.c.b16 %v1992, %v1990
    %v2093 = vpack.c.b16 %v1995, %v1993
    %v2094 = vpack.c.b16 %v1996, %v1994
    %v2095 = vpack.c.b16 %v1999, %v1997
    %v2096 = vpack.c.b16 %v2000, %v1998
    %v2097 = vpack.c.b16 %v2003, %v2001
    %v2098 = vpack.c.b16 %v2004, %v2002
    %v2099 = vpack.c.b16 %v2007, %v2005
    %v2100 = vpack.c.b16 %v2008, %v2006
    %v2101 = vpack.c.b16 %v2011, %v2009
    %v2102 = vpack.c.b16 %v2012, %v2010
    %v2103 = vpack.c.b16 %v2015, %v2013
    %v2104 = vpack.c.b16 %v2016, %v2014
    %v2105 = vpack.c.b16 %v2019, %v2017
    %v2106 = vpack.c.b16 %v2020, %v2018
    %v2107 = vpack.c.b16 %v2023, %v2021
    %v2108 = vpack.c.b16 %v2024, %v2022
    %v2109 = vpack.c.b16 %v2027, %v2025
    %v2110 = vpack.c.b16 %v2028, %v2026
    %v2111 = vpack.c.b16 %v2031, %v2029
    %v2112 = vpack.c.b16 %v2032, %v2030
    %v2113 = vpack.c.b16 %v2035, %v2033
    %v2114 = vpack.c.b16 %v2036, %v2034
    %v2115 = vpack.c.b16 %v2039, %v2037
    %v2116 = vpack.c.b16 %v2040, %v2038
    %v2117 = vpack.c.b16 %v2043, %v2041
    %v2118 = vpack.c.b16 %v2044, %v2042
    %v2119 = vpack.c.b16 %v2047, %v2045
    %v2120 = vpack.c.b16 %v2048, %v2046
    %v2121 = vpack.c.b16 %v2051, %v2049
    %v2122 = vpack.c.b16 %v2052, %v2050
    %v2123 = vpack.c.b16 %v2055, %v2053
    %v2124 = vpack.c.b16 %v2056, %v2054
    %v2125 = vpack.c.b16 %v2059, %v2057
    %v2126 = vpack.c.b16 %v2060, %v2058
    %v2127 = vpack.c.b16 %v2063, %v2061
    %v2128 = vpack.c.b16 %v2064, %v2062
    %2193 = vmatprep.subr.bf16.mxu0 %v2066
    %2194 = vmatpush1.bf16.msra.mxu0 %v2065
    %2195 = vmatprep.subr.bf16.mxu0 %v2068
    %2196 = vmatpush1.bf16.msra.mxu0 %v2067
    %2197 = vmatprep.subr.bf16.mxu0 %v2070
    %2198 = vmatpush1.bf16.msra.mxu0 %v2069
    %2199 = vmatprep.subr.bf16.mxu0 %v2072
    %2200 = vmatpush1.bf16.msra.mxu0 %v2071
    %2201 = vmatprep.subr.bf16.mxu0 %v2074
    %2202 = vmatpush1.bf16.msra.mxu0 %v2073
    %2203 = vmatprep.subr.bf16.mxu0 %v2076
    %2204 = vmatpush1.bf16.msra.mxu0 %v2075
    %2205 = vmatprep.subr.bf16.mxu0 %v2078
    %2206 = vmatpush1.bf16.msra.mxu0 %v2077
    %2207 = vmatprep.subr.bf16.mxu0 %v2080
    %2208 = vmatpush1.bf16.msra.mxu0 %v2079
    %2209 = vmatprep.subr.bf16.mxu0 %v2082
    %2210 = vmatpush1.bf16.msra.mxu0 %v2081
    %2211 = vmatprep.subr.bf16.mxu0 %v2084
    %2212 = vmatpush1.bf16.msra.mxu0 %v2083
    %2213 = vmatprep.subr.bf16.mxu0 %v2086
    %2214 = vmatpush1.bf16.msra.mxu0 %v2085
    %2215 = vmatprep.subr.bf16.mxu0 %v2088
    %2216 = vmatpush1.bf16.msra.mxu0 %v2087
    %2217 = vmatprep.subr.bf16.mxu0 %v2090
    %2218 = vmatpush1.bf16.msra.mxu0 %v2089
    %2219 = vmatprep.subr.bf16.mxu0 %v2092
    %2220 = vmatpush1.bf16.msra.mxu0 %v2091
    %2221 = vmatprep.subr.bf16.mxu0 %v2094
    %2222 = vmatpush1.bf16.msra.mxu0 %v2093
    %2223 = vmatprep.subr.bf16.mxu0 %v2096
    %2224 = vmatpush1.bf16.msra.mxu0 %v2095
    %2225 = vmatprep.mubr.bf16.mxu0 %v1794
    %2226 = vmatmul.mubr.bf16.gmra.mrb[0].mxu0 %v1793
    %v2227 = vpop.f32.mrb[0].mxu0
    %v2228 = vadd.f32 %v1866, %v2227
    %v2229 = vpop.f32.mrb[0].mxu0
    %v2230 = vadd.f32 %v1870, %v2229
    %v2231 = vpop.f32.mrb[0].mxu0
    %v2232 = vpop.f32.mrb[0].mxu0
    %2233 = vdwg.mxu0
    %2234 = vmatprep.subr.bf16.mxu0 %v2098
    %2235 = vmatpush1.bf16.msra.mxu0 %v2097
    %2236 = vmatprep.subr.bf16.mxu0 %v2100
    %2237 = vmatpush1.bf16.msra.mxu0 %v2099
    %2238 = vmatprep.subr.bf16.mxu0 %v2102
    %2239 = vmatpush1.bf16.msra.mxu0 %v2101
    %2240 = vmatprep.subr.bf16.mxu0 %v2104
    %2241 = vmatpush1.bf16.msra.mxu0 %v2103
    %2242 = vmatprep.subr.bf16.mxu0 %v2106
    %2243 = vmatpush1.bf16.msra.mxu0 %v2105
    %2244 = vmatprep.subr.bf16.mxu0 %v2108
    %2245 = vmatpush1.bf16.msra.mxu0 %v2107
    %2246 = vmatprep.subr.bf16.mxu0 %v2110
    %2247 = vmatpush1.bf16.msra.mxu0 %v2109
    %2248 = vmatprep.subr.bf16.mxu0 %v2112
    %2249 = vmatpush1.bf16.msra.mxu0 %v2111
    %2250 = vmatprep.subr.bf16.mxu0 %v2114
    %2251 = vmatpush1.bf16.msra.mxu0 %v2113
    %2252 = vmatprep.subr.bf16.mxu0 %v2116
    %2253 = vmatpush1.bf16.msra.mxu0 %v2115
    %2254 = vmatprep.subr.bf16.mxu0 %v2118
    %2255 = vmatpush1.bf16.msra.mxu0 %v2117
    %2256 = vmatprep.subr.bf16.mxu0 %v2120
    %2257 = vmatpush1.bf16.msra.mxu0 %v2119
    %2258 = vmatprep.subr.bf16.mxu0 %v2122
    %2259 = vmatpush1.bf16.msra.mxu0 %v2121
    %2260 = vmatprep.subr.bf16.mxu0 %v2124
    %2261 = vmatpush1.bf16.msra.mxu0 %v2123
    %2262 = vmatprep.subr.bf16.mxu0 %v2126
    %2263 = vmatpush1.bf16.msra.mxu0 %v2125
    %2264 = vmatprep.subr.bf16.mxu0 %v2128
    %2265 = vmatpush1.bf16.msra.mxu0 %v2127
    %2266 = vmatprep.mubr.bf16.mxu0 %v1796
    %2267 = vmatmul.mubr.bf16.gmra.mrb[0].mxu0 %v1795
    %v2268 = vpop.f32.mrb[0].mxu0
    %v2269 = vadd.f32 %v2228, %v2268
    %v2270 = vpop.f32.mrb[0].mxu0
    %v2271 = vadd.f32 %v2230, %v2270
    %v2272 = vpop.f32.mrb[0].mxu0
    %v2273 = vpop.f32.mrb[0].mxu0
    %2274 = vdwg.mxu0
    %v2275 = vmax.f32 %v2269, 0.0
    %v2276 = vmax.f32 %v2271, 0.0
    %v2277 = vrot.slane %v2275, 4
    %v2278 = vadd.f32 %v2275, %v2277
    %v2279 = vrot.slane %v2278, 2
    %v2280 = vadd.f32 %v2278, %v2279
    %v2281 = vrot.slane %v2280, 1
    %v2282 = vadd.f32 %v2280, %v2281
    %v2283 = vrot.slane %v2276, 4
    %v2284 = vadd.f32 %v2276, %v2283
    %v2285 = vrot.slane %v2284, 2
    %v2286 = vadd.f32 %v2284, %v2285
    %v2287 = vrot.slane %v2286, 1
    %v2288 = vadd.f32 %v2286, %v2287
    %v2289 = vmul.f32 %v2282, %v470
    %v2290 = vmul.f32 %v2288, %v470
    %v2291 = vmul.f32 %v2275, %v2275
    %v2292 = vmul.f32 %v2276, %v2276
    %v2293 = vrot.slane %v2291, 4
    %v2294 = vadd.f32 %v2291, %v2293
    %v2295 = vrot.slane %v2294, 2
    %v2296 = vadd.f32 %v2294, %v2295
    %v2297 = vrot.slane %v2296, 1
    %v2298 = vadd.f32 %v2296, %v2297
    %v2299 = vrot.slane %v2292, 4
    %v2300 = vadd.f32 %v2292, %v2299
    %v2301 = vrot.slane %v2300, 2
    %v2302 = vadd.f32 %v2300, %v2301
    %v2303 = vrot.slane %v2302, 1
    %v2304 = vadd.f32 %v2302, %v2303
    %v2305 = vmul.f32 %v2298, %v470
    %v2306 = vmul.f32 %v2304, %v470
    %v2307 = vmul.f32 %v2289, %v2289
    %v2308 = vmul.f32 %v2290, %v2290
    %v2309 = vsub.f32 %v2305, %v2307
    %v2310 = vsub.f32 %v2306, %v2308
    %v2311 = vld [vmem:[%s11] sm:$0x3]
    %v2312 = vadd.f32 %v2309, 1e-05
    %v2313 = vadd.f32 %v2310, 1e-05
    %v2314 = vrsqrt.pop %v2312
    %v2315 = vrsqrt.pop %v2313
    %v2318 = vcombine.low %v2314, %v2315
    %v2320 = vunpack.c.l.s4 1966171168
    %v2321 = vunpack.c.0.s8 %v2320
    %v2322 = vlaneseq
    %v2323 = vshrl.u32 %v2322, 7
    %v2324 = vsub.s32 %v2321, %v2323
    %v2325 = vrot.slane %v2318, %v2324
    %v2327 = vunpack.c.l.s4 1966171168
    %v2328 = vunpack.c.0.s8 %v2327
    %v2329 = vlaneseq
    %v2330 = vshrl.u32 %v2329, 7
    %v2331 = vsub.s32 %v2328, %v2330
    %v2332 = vrot.slane %v2325, %v2331
    %v2334 = vmul.f32 %v2311, %v2332
    %v2335 = vld [vmem:[%s12] sm:$0x3]
    %v2337 = vlaneseq
    %v2338 = vshrl.u32 %v2337, 7
    %v2339 = vsub.s32 0, %v2338
    %v2340 = vrot.slane %v2334, %v2339
    %v2341 = vlaneseq
    %v2342 = vshrl.u32 %v2341, 7
    %v2343 = vsub.s32 1, %v2342
    %v2344 = vrot.slane %v2334, %v2343
    %v2347 = vmul.f32 %v2289, %v2340
    %v2348 = vmul.f32 %v2290, %v2344
    %v2351 = vcombine.low %v2347, %v2348
    %v2353 = vunpack.c.l.s4 1966171168
    %v2354 = vunpack.c.0.s8 %v2353
    %v2355 = vlaneseq
    %v2356 = vshrl.u32 %v2355, 7
    %v2357 = vsub.s32 %v2354, %v2356
    %v2358 = vrot.slane %v2351, %v2357
    %v2360 = vunpack.c.l.s4 1966171168
    %v2361 = vunpack.c.0.s8 %v2360
    %v2362 = vlaneseq
    %v2363 = vshrl.u32 %v2362, 7
    %v2364 = vsub.s32 %v2361, %v2363
    %v2365 = vrot.slane %v2358, %v2364
    %v2367 = vsub.f32 %v2335, %v2365
    %v2368 = vmul.f32 %v2275, %v2340
    %v2369 = vmul.f32 %v2276, %v2344
    %v2371 = vlaneseq
    %v2372 = vshrl.u32 %v2371, 7
    %v2373 = vsub.s32 0, %v2372
    %v2374 = vrot.slane %v2367, %v2373
    %v2375 = vlaneseq
    %v2376 = vshrl.u32 %v2375, 7
    %v2377 = vsub.s32 1, %v2376
    %v2378 = vrot.slane %v2367, %v2377
    %v2381 = vadd.f32 %v2368, %v2374
    %v2382 = vadd.f32 %v2369, %v2378
    %v2383 = vpack.c.bf16 %v2381, %v2381
    %v2384 = vpack.c.bf16 %v2382, %v2382
    %v2385 = vld [vmem:[#allocation10] sm:$0xff]
    %v2386 = vld [vmem:[#allocation10 + $0x8] sm:$0xff]
    %v2387 = vld [vmem:[#allocation10 + $0x10] sm:$0xff]
    %v2388 = vld [vmem:[#allocation10 + $0x18] sm:$0xff]
    %v2389 = vld [vmem:[#allocation10 + $0x20] sm:$0xff]
    %v2390 = vld [vmem:[#allocation10 + $0x28] sm:$0xff]
    %v2391 = vld [vmem:[#allocation10 + $0x30] sm:$0xff]
    %v2392 = vld [vmem:[#allocation10 + $0x38] sm:$0xff]
    %v2393 = vld [vmem:[#allocation10 + $0x40] sm:$0xff]
    %v2394 = vld [vmem:[#allocation10 + $0x48] sm:$0xff]
    %v2395 = vld [vmem:[#allocation10 + $0x50] sm:$0xff]
    %v2396 = vld [vmem:[#allocation10 + $0x58] sm:$0xff]
    %v2397 = vld [vmem:[#allocation10 + $0x60] sm:$0xff]
    %v2398 = vld [vmem:[#allocation10 + $0x68] sm:$0xff]
    %v2399 = vld [vmem:[#allocation10 + $0x70] sm:$0xff]
    %v2400 = vld [vmem:[#allocation10 + $0x78] sm:$0xff]
    %v2401 = vld [vmem:[#allocation10 + $0x80] sm:$0xff]
    %v2402 = vld [vmem:[#allocation10 + $0x88] sm:$0xff]
    %v2403 = vld [vmem:[#allocation10 + $0x90] sm:$0xff]
    %v2404 = vld [vmem:[#allocation10 + $0x98] sm:$0xff]
    %v2405 = vld [vmem:[#allocation10 + $0xa0] sm:$0xff]
    %v2406 = vld [vmem:[#allocation10 + $0xa8] sm:$0xff]
    %v2407 = vld [vmem:[#allocation10 + $0xb0] sm:$0xff]
    %v2408 = vld [vmem:[#allocation10 + $0xb8] sm:$0xff]
    %v2409 = vld [vmem:[#allocation10 + $0xc0] sm:$0xff]
    %v2410 = vld [vmem:[#allocation10 + $0xc8] sm:$0xff]
    %v2411 = vld [vmem:[#allocation10 + $0xd0] sm:$0xff]
    %v2412 = vld [vmem:[#allocation10 + $0xd8] sm:$0xff]
    %v2413 = vld [vmem:[#allocation10 + $0xe0] sm:$0xff]
    %v2414 = vld [vmem:[#allocation10 + $0xe8] sm:$0xff]
    %v2415 = vld [vmem:[#allocation10 + $0xf0] sm:$0xff]
    %v2416 = vld [vmem:[#allocation10 + $0xf8] sm:$0xff]
    %v2417 = vld [vmem:[%s14] sm:$0x3]
    %v2419 = vlaneseq
    %v2420 = vshrl.u32 %v2419, 7
    %v2421 = vsub.s32 0, %v2420
    %v2422 = vrot.slane %v2417, %v2421
    %v2423 = vlaneseq
    %v2424 = vshrl.u32 %v2423, 7
    %v2425 = vsub.s32 1, %v2424
    %v2426 = vrot.slane %v2417, %v2425
    %v2461 = vunpack.c.l.b16 %v2385
    %v2462 = vunpack.c.h.b16 %v2385
    %v2463 = vunpack.c.l.b16 %v2386
    %v2464 = vunpack.c.h.b16 %v2386
    %v2465 = vunpack.c.l.b16 %v2387
    %v2466 = vunpack.c.h.b16 %v2387
    %v2467 = vunpack.c.l.b16 %v2388
    %v2468 = vunpack.c.h.b16 %v2388
    %v2469 = vunpack.c.l.b16 %v2389
    %v2470 = vunpack.c.h.b16 %v2389
    %v2471 = vunpack.c.l.b16 %v2390
    %v2472 = vunpack.c.h.b16 %v2390
    %v2473 = vunpack.c.l.b16 %v2391
    %v2474 = vunpack.c.h.b16 %v2391
    %v2475 = vunpack.c.l.b16 %v2392
    %v2476 = vunpack.c.h.b16 %v2392
    %v2477 = vunpack.c.l.b16 %v2393
    %v2478 = vunpack.c.h.b16 %v2393
    %v2479 = vunpack.c.l.b16 %v2394
    %v2480 = vunpack.c.h.b16 %v2394
    %v2481 = vunpack.c.l.b16 %v2395
    %v2482 = vunpack.c.h.b16 %v2395
    %v2483 = vunpack.c.l.b16 %v2396
    %v2484 = vunpack.c.h.b16 %v2396
    %v2485 = vunpack.c.l.b16 %v2397
    %v2486 = vunpack.c.h.b16 %v2397
    %v2487 = vunpack.c.l.b16 %v2398
    %v2488 = vunpack.c.h.b16 %v2398
    %v2489 = vunpack.c.l.b16 %v2399
    %v2490 = vunpack.c.h.b16 %v2399
    %v2491 = vunpack.c.l.b16 %v2400
    %v2492 = vunpack.c.h.b16 %v2400
    %v2493 = vunpack.c.l.b16 %v2401
    %v2494 = vunpack.c.h.b16 %v2401
    %v2495 = vunpack.c.l.b16 %v2402
    %v2496 = vunpack.c.h.b16 %v2402
    %v2497 = vunpack.c.l.b16 %v2403
    %v2498 = vunpack.c.h.b16 %v2403
    %v2499 = vunpack.c.l.b16 %v2404
    %v2500 = vunpack.c.h.b16 %v2404
    %v2501 = vunpack.c.l.b16 %v2405
    %v2502 = vunpack.c.h.b16 %v2405
    %v2503 = vunpack.c.l.b16 %v2406
    %v2504 = vunpack.c.h.b16 %v2406
    %v2505 = vunpack.c.l.b16 %v2407
    %v2506 = vunpack.c.h.b16 %v2407
    %v2507 = vunpack.c.l.b16 %v2408
    %v2508 = vunpack.c.h.b16 %v2408
    %v2509 = vunpack.c.l.b16 %v2409
    %v2510 = vunpack.c.h.b16 %v2409
    %v2511 = vunpack.c.l.b16 %v2410
    %v2512 = vunpack.c.h.b16 %v2410
    %v2513 = vunpack.c.l.b16 %v2411
    %v2514 = vunpack.c.h.b16 %v2411
    %v2515 = vunpack.c.l.b16 %v2412
    %v2516 = vunpack.c.h.b16 %v2412
    %v2517 = vunpack.c.l.b16 %v2413
    %v2518 = vunpack.c.h.b16 %v2413
    %v2519 = vunpack.c.l.b16 %v2414
    %v2520 = vunpack.c.h.b16 %v2414
    %v2521 = vunpack.c.l.b16 %v2415
    %v2522 = vunpack.c.h.b16 %v2415
    %v2523 = vunpack.c.l.b16 %v2416
    %v2524 = vunpack.c.h.b16 %v2416
    %v2525 = vpack.c.b16 %v2463, %v2461
    %v2526 = vpack.c.b16 %v2464, %v2462
    %v2527 = vpack.c.b16 %v2467, %v2465
    %v2528 = vpack.c.b16 %v2468, %v2466
    %v2529 = vpack.c.b16 %v2471, %v2469
    %v2530 = vpack.c.b16 %v2472, %v2470
    %v2531 = vpack.c.b16 %v2475, %v2473
    %v2532 = vpack.c.b16 %v2476, %v2474
    %v2533 = vpack.c.b16 %v2479, %v2477
    %v2534 = vpack.c.b16 %v2480, %v2478
    %v2535 = vpack.c.b16 %v2483, %v2481
    %v2536 = vpack.c.b16 %v2484, %v2482
    %v2537 = vpack.c.b16 %v2487, %v2485
    %v2538 = vpack.c.b16 %v2488, %v2486
    %v2539 = vpack.c.b16 %v2491, %v2489
    %v2540 = vpack.c.b16 %v2492, %v2490
    %v2541 = vpack.c.b16 %v2495, %v2493
    %v2542 = vpack.c.b16 %v2496, %v2494
    %v2543 = vpack.c.b16 %v2499, %v2497
    %v2544 = vpack.c.b16 %v2500, %v2498
    %v2545 = vpack.c.b16 %v2503, %v2501
    %v2546 = vpack.c.b16 %v2504, %v2502
    %v2547 = vpack.c.b16 %v2507, %v2505
    %v2548 = vpack.c.b16 %v2508, %v2506
    %v2549 = vpack.c.b16 %v2511, %v2509
    %v2550 = vpack.c.b16 %v2512, %v2510
    %v2551 = vpack.c.b16 %v2515, %v2513
    %v2552 = vpack.c.b16 %v2516, %v2514
    %v2553 = vpack.c.b16 %v2519, %v2517
    %v2554 = vpack.c.b16 %v2520, %v2518
    %v2555 = vpack.c.b16 %v2523, %v2521
    %v2556 = vpack.c.b16 %v2524, %v2522
    %2589 = vmatprep.subr.bf16.mxu0 %v2526
    %2590 = vmatpush1.bf16.msra.mxu0 %v2525
    %2591 = vmatprep.subr.bf16.mxu0 %v2528
    %2592 = vmatpush1.bf16.msra.mxu0 %v2527
    %2593 = vmatprep.subr.bf16.mxu0 %v2530
    %2594 = vmatpush1.bf16.msra.mxu0 %v2529
    %2595 = vmatprep.subr.bf16.mxu0 %v2532
    %2596 = vmatpush1.bf16.msra.mxu0 %v2531
    %2597 = vmatprep.subr.bf16.mxu0 %v2534
    %2598 = vmatpush1.bf16.msra.mxu0 %v2533
    %2599 = vmatprep.subr.bf16.mxu0 %v2536
    %2600 = vmatpush1.bf16.msra.mxu0 %v2535
    %2601 = vmatprep.subr.bf16.mxu0 %v2538
    %2602 = vmatpush1.bf16.msra.mxu0 %v2537
    %2603 = vmatprep.subr.bf16.mxu0 %v2540
    %2604 = vmatpush1.bf16.msra.mxu0 %v2539
    %2605 = vmatprep.subr.bf16.mxu0 %v2542
    %2606 = vmatpush1.bf16.msra.mxu0 %v2541
    %2607 = vmatprep.subr.bf16.mxu0 %v2544
    %2608 = vmatpush1.bf16.msra.mxu0 %v2543
    %2609 = vmatprep.subr.bf16.mxu0 %v2546
    %2610 = vmatpush1.bf16.msra.mxu0 %v2545
    %2611 = vmatprep.subr.bf16.mxu0 %v2548
    %2612 = vmatpush1.bf16.msra.mxu0 %v2547
    %2613 = vmatprep.subr.bf16.mxu0 %v2550
    %2614 = vmatpush1.bf16.msra.mxu0 %v2549
    %2615 = vmatprep.subr.bf16.mxu0 %v2552
    %2616 = vmatpush1.bf16.msra.mxu0 %v2551
    %2617 = vmatprep.subr.bf16.mxu0 %v2554
    %2618 = vmatpush1.bf16.msra.mxu0 %v2553
    %2619 = vmatprep.subr.bf16.mxu0 %v2556
    %2620 = vmatpush1.bf16.msra.mxu0 %v2555
    %2621 = vmatprep.mubr.bf16.mxu0 %v2384
    %2622 = vmatmul.mubr.bf16.gmra.mrb[0].mxu0 %v2383
    %v2623 = vpop.f32.mrb[0].mxu0
    %v2624 = vadd.f32 %v2422, %v2623
    %v2625 = vpop.f32.mrb[0].mxu0
    %v2626 = vadd.f32 %v2426, %v2625
    %v2627 = vpop.f32.mrb[0].mxu0
    %v2628 = vpop.f32.mrb[0].mxu0
    %2629 = vdwg.mxu0
    %v2630 = vmax.f32 %v2624, 0.0
    %v2631 = vmax.f32 %v2626, 0.0
    %v2632 = vrot.slane %v2630, 4
    %v2633 = vadd.f32 %v2630, %v2632
    %v2634 = vrot.slane %v2633, 2
    %v2635 = vadd.f32 %v2633, %v2634
    %v2636 = vrot.slane %v2635, 1
    %v2637 = vadd.f32 %v2635, %v2636
    %v2638 = vrot.slane %v2631, 4
    %v2639 = vadd.f32 %v2631, %v2638
    %v2640 = vrot.slane %v2639, 2
    %v2641 = vadd.f32 %v2639, %v2640
    %v2642 = vrot.slane %v2641, 1
    %v2643 = vadd.f32 %v2641, %v2642
    %v2644 = vmul.f32 %v2637, %v470
    %v2645 = vmul.f32 %v2643, %v470
    %v2646 = vmul.f32 %v2630, %v2630
    %v2647 = vmul.f32 %v2631, %v2631
    %v2648 = vrot.slane %v2646, 4
    %v2649 = vadd.f32 %v2646, %v2648
    %v2650 = vrot.slane %v2649, 2
    %v2651 = vadd.f32 %v2649, %v2650
    %v2652 = vrot.slane %v2651, 1
    %v2653 = vadd.f32 %v2651, %v2652
    %v2654 = vrot.slane %v2647, 4
    %v2655 = vadd.f32 %v2647, %v2654
    %v2656 = vrot.slane %v2655, 2
    %v2657 = vadd.f32 %v2655, %v2656
    %v2658 = vrot.slane %v2657, 1
    %v2659 = vadd.f32 %v2657, %v2658
    %v2660 = vmul.f32 %v2653, %v470
    %v2661 = vmul.f32 %v2659, %v470
    %v2662 = vmul.f32 %v2644, %v2644
    %v2663 = vmul.f32 %v2645, %v2645
    %v2664 = vsub.f32 %v2660, %v2662
    %v2665 = vsub.f32 %v2661, %v2663
    %v2666 = vld [vmem:[%s15] sm:$0x3]
    %v2667 = vadd.f32 %v2664, 1e-05
    %v2668 = vadd.f32 %v2665, 1e-05
    %v2669 = vrsqrt.pop %v2667
    %v2670 = vrsqrt.pop %v2668
    %v2673 = vcombine.low %v2669, %v2670
    %v2675 = vunpack.c.l.s4 1966171168
    %v2676 = vunpack.c.0.s8 %v2675
    %v2677 = vlaneseq
    %v2678 = vshrl.u32 %v2677, 7
    %v2679 = vsub.s32 %v2676, %v2678
    %v2680 = vrot.slane %v2673, %v2679
    %v2682 = vunpack.c.l.s4 1966171168
    %v2683 = vunpack.c.0.s8 %v2682
    %v2684 = vlaneseq
    %v2685 = vshrl.u32 %v2684, 7
    %v2686 = vsub.s32 %v2683, %v2685
    %v2687 = vrot.slane %v2680, %v2686
    %v2689 = vmul.f32 %v2666, %v2687
    %v2690 = vld [vmem:[%s16] sm:$0x3]
    %v2692 = vlaneseq
    %v2693 = vshrl.u32 %v2692, 7
    %v2694 = vsub.s32 0, %v2693
    %v2695 = vrot.slane %v2689, %v2694
    %v2696 = vlaneseq
    %v2697 = vshrl.u32 %v2696, 7
    %v2698 = vsub.s32 1, %v2697
    %v2699 = vrot.slane %v2689, %v2698
    %v2702 = vmul.f32 %v2644, %v2695
    %v2703 = vmul.f32 %v2645, %v2699
    %v2706 = vcombine.low %v2702, %v2703
    %v2708 = vunpack.c.l.s4 1966171168
    %v2709 = vunpack.c.0.s8 %v2708
    %v2710 = vlaneseq
    %v2711 = vshrl.u32 %v2710, 7
    %v2712 = vsub.s32 %v2709, %v2711
    %v2713 = vrot.slane %v2706, %v2712
    %v2715 = vunpack.c.l.s4 1966171168
    %v2716 = vunpack.c.0.s8 %v2715
    %v2717 = vlaneseq
    %v2718 = vshrl.u32 %v2717, 7
    %v2719 = vsub.s32 %v2716, %v2718
    %v2720 = vrot.slane %v2713, %v2719
    %v2722 = vsub.f32 %v2690, %v2720
    %v2723 = vmul.f32 %v2630, %v2695
    %v2724 = vmul.f32 %v2631, %v2699
    %v2726 = vlaneseq
    %v2727 = vshrl.u32 %v2726, 7
    %v2728 = vsub.s32 0, %v2727
    %v2729 = vrot.slane %v2722, %v2728
    %v2730 = vlaneseq
    %v2731 = vshrl.u32 %v2730, 7
    %v2732 = vsub.s32 1, %v2731
    %v2733 = vrot.slane %v2722, %v2732
    %v2736 = vadd.f32 %v2723, %v2729
    %v2737 = vadd.f32 %v2724, %v2733
    %v2738 = vpack.c.bf16 %v2736, %v2736
    %v2739 = vpack.c.bf16 %v2737, %v2737
    %v2740 = vld [vmem:[#allocation11] sm:$0xf]
    %v2741 = vld [vmem:[#allocation11 + $0x4] sm:$0xf]
    %v2742 = vld [vmem:[#allocation11 + $0x8] sm:$0xf]
    %v2743 = vld [vmem:[#allocation11 + $0xc] sm:$0xf]
    %v2744 = vld [vmem:[#allocation11 + $0x10] sm:$0xf]
    %v2745 = vld [vmem:[#allocation11 + $0x14] sm:$0xf]
    %v2746 = vld [vmem:[#allocation11 + $0x18] sm:$0xf]
    %v2747 = vld [vmem:[#allocation11 + $0x1c] sm:$0xf]
    %v2748 = vld [vmem:[#allocation11 + $0x20] sm:$0xf]
    %v2749 = vld [vmem:[#allocation11 + $0x24] sm:$0xf]
    %v2750 = vld [vmem:[#allocation11 + $0x28] sm:$0xf]
    %v2751 = vld [vmem:[#allocation11 + $0x2c] sm:$0xf]
    %v2752 = vld [vmem:[#allocation11 + $0x30] sm:$0xf]
    %v2753 = vld [vmem:[#allocation11 + $0x34] sm:$0xf]
    %v2754 = vld [vmem:[#allocation11 + $0x38] sm:$0xf]
    %v2755 = vld [vmem:[#allocation11 + $0x3c] sm:$0xf]
    %v2756 = vld [vmem:[#allocation11 + $0x40] sm:$0xf]
    %v2757 = vld [vmem:[#allocation11 + $0x44] sm:$0xf]
    %v2758 = vld [vmem:[#allocation11 + $0x48] sm:$0xf]
    %v2759 = vld [vmem:[#allocation11 + $0x4c] sm:$0xf]
    %v2760 = vld [vmem:[#allocation11 + $0x50] sm:$0xf]
    %v2761 = vld [vmem:[#allocation11 + $0x54] sm:$0xf]
    %v2762 = vld [vmem:[#allocation11 + $0x58] sm:$0xf]
    %v2763 = vld [vmem:[#allocation11 + $0x5c] sm:$0xf]
    %v2764 = vld [vmem:[#allocation11 + $0x60] sm:$0xf]
    %v2765 = vld [vmem:[#allocation11 + $0x64] sm:$0xf]
    %v2766 = vld [vmem:[#allocation11 + $0x68] sm:$0xf]
    %v2767 = vld [vmem:[#allocation11 + $0x6c] sm:$0xf]
    %v2768 = vld [vmem:[#allocation11 + $0x70] sm:$0xf]
    %v2769 = vld [vmem:[#allocation11 + $0x74] sm:$0xf]
    %v2770 = vld [vmem:[#allocation11 + $0x78] sm:$0xf]
    %v2771 = vld [vmem:[#allocation11 + $0x7c] sm:$0xf]
    %v2772 = vld [vmem:[%s18] sm:$0x1]
    %v2774 = vlaneseq
    %v2775 = vshrl.u32 %v2774, 7
    %v2776 = vsub.s32 0, %v2775
    %v2777 = vrot.slane %v2772, %v2776
    %v2811 = vunpack.c.l.b16 %v2740
    %v2812 = vunpack.c.l.b16 %v2741
    %v2813 = vunpack.c.l.b16 %v2742
    %v2814 = vunpack.c.l.b16 %v2743
    %v2815 = vunpack.c.l.b16 %v2744
    %v2816 = vunpack.c.l.b16 %v2745
    %v2817 = vunpack.c.l.b16 %v2746
    %v2818 = vunpack.c.l.b16 %v2747
    %v2819 = vunpack.c.l.b16 %v2748
    %v2820 = vunpack.c.l.b16 %v2749
    %v2821 = vunpack.c.l.b16 %v2750
    %v2822 = vunpack.c.l.b16 %v2751
    %v2823 = vunpack.c.l.b16 %v2752
    %v2824 = vunpack.c.l.b16 %v2753
    %v2825 = vunpack.c.l.b16 %v2754
    %v2826 = vunpack.c.l.b16 %v2755
    %v2827 = vunpack.c.l.b16 %v2756
    %v2828 = vunpack.c.l.b16 %v2757
    %v2829 = vunpack.c.l.b16 %v2758
    %v2830 = vunpack.c.l.b16 %v2759
    %v2831 = vunpack.c.l.b16 %v2760
    %v2832 = vunpack.c.l.b16 %v2761
    %v2833 = vunpack.c.l.b16 %v2762
    %v2834 = vunpack.c.l.b16 %v2763
    %v2835 = vunpack.c.l.b16 %v2764
    %v2836 = vunpack.c.l.b16 %v2765
    %v2837 = vunpack.c.l.b16 %v2766
    %v2838 = vunpack.c.l.b16 %v2767
    %v2839 = vunpack.c.l.b16 %v2768
    %v2840 = vunpack.c.l.b16 %v2769
    %v2841 = vunpack.c.l.b16 %v2770
    %v2842 = vunpack.c.l.b16 %v2771
    %v2843 = vpack.c.b16 %v2812, %v2811
    %v2844 = vpack.c.b16 %v2814, %v2813
    %v2845 = vpack.c.b16 %v2816, %v2815
    %v2846 = vpack.c.b16 %v2818, %v2817
    %v2847 = vpack.c.b16 %v2820, %v2819
    %v2848 = vpack.c.b16 %v2822, %v2821
    %v2849 = vpack.c.b16 %v2824, %v2823
    %v2850 = vpack.c.b16 %v2826, %v2825
    %v2851 = vpack.c.b16 %v2828, %v2827
    %v2852 = vpack.c.b16 %v2830, %v2829
    %v2853 = vpack.c.b16 %v2832, %v2831
    %v2854 = vpack.c.b16 %v2834, %v2833
    %v2855 = vpack.c.b16 %v2836, %v2835
    %v2856 = vpack.c.b16 %v2838, %v2837
    %v2857 = vpack.c.b16 %v2840, %v2839
    %v2858 = vpack.c.b16 %v2842, %v2841
    %2875 = vmatprep.subr.bf16.mxu0 0
    %2876 = vmatpush1.bf16.msra.mxu0 %v2843
    %2877 = vmatprep.subr.bf16.mxu0 0
    %2878 = vmatpush1.bf16.msra.mxu0 %v2844
    %2879 = vmatprep.subr.bf16.mxu0 0
    %2880 = vmatpush1.bf16.msra.mxu0 %v2845
    %2881 = vmatprep.subr.bf16.mxu0 0
    %2882 = vmatpush1.bf16.msra.mxu0 %v2846
    %2883 = vmatprep.subr.bf16.mxu0 0
    %2884 = vmatpush1.bf16.msra.mxu0 %v2847
    %2885 = vmatprep.subr.bf16.mxu0 0
    %2886 = vmatpush1.bf16.msra.mxu0 %v2848
    %2887 = vmatprep.subr.bf16.mxu0 0
    %2888 = vmatpush1.bf16.msra.mxu0 %v2849
    %2889 = vmatprep.subr.bf16.mxu0 0
    %2890 = vmatpush1.bf16.msra.mxu0 %v2850
    %2891 = vmatprep.subr.bf16.mxu0 0
    %2892 = vmatpush1.bf16.msra.mxu0 %v2851
    %2893 = vmatprep.subr.bf16.mxu0 0
    %2894 = vmatpush1.bf16.msra.mxu0 %v2852
    %2895 = vmatprep.subr.bf16.mxu0 0
    %2896 = vmatpush1.bf16.msra.mxu0 %v2853
    %2897 = vmatprep.subr.bf16.mxu0 0
    %2898 = vmatpush1.bf16.msra.mxu0 %v2854
    %2899 = vmatprep.subr.bf16.mxu0 0
    %2900 = vmatpush1.bf16.msra.mxu0 %v2855
    %2901 = vmatprep.subr.bf16.mxu0 0
    %2902 = vmatpush1.bf16.msra.mxu0 %v2856
    %2903 = vmatprep.subr.bf16.mxu0 0
    %2904 = vmatpush1.bf16.msra.mxu0 %v2857
    %2905 = vmatprep.subr.bf16.mxu0 0
    %2906 = vmatpush1.bf16.msra.mxu0 %v2858
    %2907 = vmatprep.mubr.bf16.mxu0 %v2739
    %2908 = vmatmul.mubr.bf16.gmra.mrb[0].mxu0 %v2738
    %v2909 = vpop.f32.mrb[0].mxu0
    %v2910 = vadd.f32 %v2777, %v2909
    %v2911 = vpop.f32.mrb[0].mxu0
    %v2912 = vpop.f32.mrb[0].mxu0
    %v2913 = vpop.f32.mrb[0].mxu0
    %2914 = vdwg.mxu0
    %2915 = vst [vmem:[#allocation13] sm:$0xff] %v2910
    // Predicated region
    $region102: #{tpu_custom_call.1} parent=1 // pred_check
      _
    $region103: #{tpu_custom_call.1} parent=1 // pred_check_branch
      %2917 = sbr.rel (0) target = $region105
    $region104: #{tpu_custom_call.1} parent=1 // pred_region
      %s2919 = ssub.s32 128, 128
      %2920 = vsyncadd [#allocation4], %s2919
      %s2922 = sshll.u32 [#allocation13], 4
      %s2923 = int_to_ptr.vmem [resolvable:$true] %s2922
      %2925 = dma.vmem_to_hbm [thread:$0]  %s2923, 128, %s19, [#allocation4]
    $region105: #{tpu_custom_call.1} parent=1 // pred_fallthru
      _
    // Predicated region
    $region106: #{tpu_custom_call.1} parent=1 // pred_check
      _
    $region107: #{tpu_custom_call.1} parent=1 // pred_check_branch
      %2927 = sbr.rel (0) target = $region109
    $region108: #{tpu_custom_call.1} parent=1 // pred_region
      %2928 = dma.done [#allocation4], 128
    $region109: #{tpu_custom_call.1} parent=1 // pred_fallthru
      _
    %2929 = vsyncpa [#allocation3], 1
    %2930 = vsyncpa [#allocation6], 1
    %2931 = vsyncpa [#allocation9], 1
    %2932 = vsyncpa [#allocation12], 1
    %2933 = vsyncpa [#allocation4], 1

</llo_original>
